<compile_context>
chip_gen: v5e
topology: v5e:2x2
jax: 0.10.0
libtpu: 0.0.40
codegen_flags: <defaults>
</compile_context>

<pallas_src>
import functools
import math

import numpy as np
import jax
import jax.numpy as jnp
from jax.experimental import pallas as pl
from jax.experimental.pallas import tpu as pltpu

EPS = 1e-5


# ---------------------------------------------------------------------------
# Offline (weights-only) operator construction — plain numpy glue.
# ---------------------------------------------------------------------------
def _bilinear_matrix(out_size: int, in_size: int) -> np.ndarray:
    """Interpolation matrix matching PyTorch bilinear, align_corners=False."""
    scale = in_size / out_size
    m = np.zeros((out_size, in_size), np.float32)
    for i in range(out_size):
        src = max((i + 0.5) * scale - 0.5, 0.0)
        i0 = min(int(np.floor(src)), in_size - 1)
        frac = src - i0
        i1 = min(i0 + 1, in_size - 1)
        m[i, i0] += 1.0 - frac
        m[i, i1] += frac
    return m


def _shift_matrix(size: int, d: int) -> np.ndarray:
    """out[y] = in[y + d - 1] with zeros outside (models zero padding of 1)."""
    s = np.zeros((size, size), np.float32)
    for y in range(size):
        r = y + d - 1
        if 0 <= r < size:
            s[y, r] = 1.0
    return s


def _pick_row_tile(R: int, bytes_per_row: int,
                   target_bytes: int = 4 * 1024 * 1024) -> int:
    """Largest row tile dividing R, multiple of 8, weight block <= target."""
    if R * bytes_per_row <= target_bytes:
        return R
    cap = max(8, target_bytes // bytes_per_row)
    best = 8
    t = 8
    while t <= min(R, cap):
        if R % t == 0:
            best = t
        t += 8
    return best


# ---------------------------------------------------------------------------
# Pass 1 kernel: folded upsample+conv matmuls + per-row BN partial sums.
# grid = (row-tiles ["parallel"], batch-tiles ["arbitrary", accumulating])
# ---------------------------------------------------------------------------
def _conv_kernel(xs_ref, bcat_ref, wl_ref, conv_ref, rsum_ref, rsq_ref, t_ref):
    n = pl.program_id(1)
    CH = xs_ref.shape[0]            # C_in * H
    L = conv_ref.shape[1]           # NB * W2   (lane-dense)

    # --- stage 1: width upsample + the 3 horizontal conv taps --------------
    # one lane-dense MXU matmul -> (CH, 3*L); scatter the three tap blocks
    # into the row-stacked T scratch so stage 2 is a single deep matmul.
    t_cat = jnp.dot(xs_ref[...], bcat_ref[...],
                    preferred_element_type=jnp.float32).astype(jnp.bfloat16)
    t_ref[0 * CH:1 * CH, :] = t_cat[:, 0 * L:1 * L]
    t_ref[1 * CH:2 * CH, :] = t_cat[:, 1 * L:2 * L]
    t_ref[2 * CH:3 * CH, :] = t_cat[:, 2 * L:3 * L]

    # --- stage 2: deep-contraction matmul (K = 3*C_in*H) -------------------
    acc = jnp.dot(wl_ref[...], t_ref[...],
                  preferred_element_type=jnp.float32)            # (TR, L) f32
    conv_ref[...] = acc

    # --- BatchNorm partial sums (per output row), accumulated over batch ---
    @pl.when(n == 0)
    def _():
        rsum_ref[...] = jnp.zeros_like(rsum_ref)
        rsq_ref[...] = jnp.zeros_like(rsq_ref)

    rsum_ref[...] += jnp.sum(acc, axis=1, keepdims=True)
    rsq_ref[...] += jnp.sum(acc * acc, axis=1, keepdims=True)


# ---------------------------------------------------------------------------
# Pass 2 kernel: mem-bound BN affine + ReLU.  grid = (channel, batch-tile)
# ---------------------------------------------------------------------------
def _bn_relu_kernel(conv_ref, rsum_ref, rsq_ref, gamma_ref, beta_ref, o_ref,
                    *, cnt):
    c = pl.program_id(0)
    s = jnp.sum(rsum_ref[...])
    s2 = jnp.sum(rsq_ref[...])
    mean = s / cnt
    var = s2 / cnt - mean * mean          # biased variance (training-mode BN)
    scale = gamma_ref[c] * jax.lax.rsqrt(var + EPS)
    shift = beta_ref[c] - mean * scale
    o_ref[...] = jnp.maximum(conv_ref[...] * scale + shift, 0.0)


# ---------------------------------------------------------------------------
# Wrapper: NCHW in, NCHW out.
# ---------------------------------------------------------------------------
def upconv_forward(x, w, bias, gamma, beta):
    # `bias` is accepted for API parity but is mathematically a no-op: a
    # per-channel constant added before training-mode BatchNorm cancels exactly
    # in (x - mean).  Dropping it saves a DMA + N full VPU adds (review item).
    del bias

    N, C_in, H, W = x.shape
    C_out = w.shape[0]
    H2, W2 = 2 * H, 2 * W
    CH = C_in * H
    R = C_out * H2
    assert H2 % 8 == 0, "H must be >= 4 so H2 is a multiple of 8"

    # --- batch tiling: pack NB samples into the lane dim (lane-dense) ------
    if W % 128 == 0:
        NB = 1
    elif 128 % W == 0:
        NB = 128 // W                   # input lanes per tile = 128
    else:
        NB = max(N, 1)                  # fallback: single batch tile
    N_pad = int(math.ceil(N / NB)) * NB
    n_bt = N_pad // NB
    L = NB * W2                         # output lanes per batch tile (>=128)
    NBW = NB * W                        # input lanes per batch tile
    Ltot = N_pad * W2

    # --- fold upsample + conv weights into matmul operators (numpy) --------
    Uh = _bilinear_matrix(H2, H)
    Uw = _bilinear_matrix(W2, W)
    Sv = np.stack([_shift_matrix(H2, d) for d in range(3)])
    Sh = np.stack([_shift_matrix(W2, d) for d in range(3)])
    A = np.einsum('dyr,rp->dyp', Sv, Uh).astype(np.float32)      # (3, H2, H)
    B = np.einsum('dxc,cq->dqx', Sh, Uw).astype(np.float32)      # (3, W, W2)

    w_np = np.asarray(w, np.float32)                              # (Co,Ci,3,3)
    blk = np.einsum('oiyx,yhp->xohip', w_np, A).astype(np.float32)
    blk = blk.reshape(3, R, CH)
    wl_cat_np = np.concatenate([blk[0], blk[1], blk[2]], axis=1)  # (R, 3*CH)

    eye = np.eye(NB, dtype=np.float32)
    b_cat_np = np.concatenate([np.kron(eye, B[d]) for d in range(3)],
                              axis=1)                             # (NBW, 3*L)

    # --- layout: x (N,C,H,W) -> xs (C*H, N_pad*W), samples along lanes -----
    x32 = jnp.asarray(x, jnp.float32)
    if N_pad != N:
        x32 = jnp.pad(x32, ((0, N_pad - N), (0, 0), (0, 0), (0, 0)))
    xs = x32.transpose(1, 2, 0, 3).reshape(CH, N_pad * W).astype(jnp.bfloat16)

    wl_cat = jnp.asarray(wl_cat_np, jnp.bfloat16)
    b_cat = jnp.asarray(b_cat_np, jnp.bfloat16)
    gamma_s = jnp.asarray(gamma, jnp.float32).reshape(C_out)
    beta_s = jnp.asarray(beta, jnp.float32).reshape(C_out)

    # Row tile sized so the bf16 weight block stays small enough for v7x VMEM.
    TR = _pick_row_tile(R, bytes_per_row=3 * CH * 2)
    n_rt = R // TR

    # ---------------- pass 1: conv matmuls + BN partial sums ---------------
    conv, rsum, rsq = pl.pallas_call(
        _conv_kernel,
        grid=(n_rt, n_bt),
        in_specs=[
            pl.BlockSpec((CH, NBW), lambda i, n: (0, n)),      # xs
            pl.BlockSpec((NBW, 3 * L), lambda i, n: (0, 0)),   # B_cat
            pl.BlockSpec((TR, 3 * CH), lambda i, n: (i, 0)),   # WL_cat
        ],
        out_specs=[
            pl.BlockSpec((TR, L), lambda i, n: (i, n)),        # un-normalized conv
            pl.BlockSpec((TR, 1), lambda i, n: (i, 0)),        # per-row sum
            pl.BlockSpec((TR, 1), lambda i, n: (i, 0)),        # per-row sum sq
        ],
        out_shape=(
            jax.ShapeDtypeStruct((R, Ltot), jnp.float32),
            jax.ShapeDtypeStruct((R, 1), jnp.float32),
            jax.ShapeDtypeStruct((R, 1), jnp.float32),
        ),
        scratch_shapes=[pltpu.VMEM((3 * CH, L), jnp.bfloat16)],
        compiler_params=pltpu.CompilerParams(
            dimension_semantics=("parallel", "arbitrary"),
            vmem_limit_bytes=48 * 1024 * 1024),
    )(xs, b_cat, wl_cat)

    # ---------------- pass 2: BN affine + ReLU (mem-bound) -----------------
    cnt = float(N * H2 * W2)            # real (un-padded) element count
    y = pl.pallas_call(
        functools.partial(_bn_relu_kernel, cnt=cnt),
        grid=(C_out, n_bt),
        in_specs=[
            pl.BlockSpec((H2, L), lambda c, j: (c, j)),
            pl.BlockSpec((H2, 1), lambda c, j: (c, 0)),
            pl.BlockSpec((H2, 1), lambda c, j: (c, 0)),
            pl.BlockSpec(memory_space=pltpu.MemorySpace.SMEM),  # gamma
            pl.BlockSpec(memory_space=pltpu.MemorySpace.SMEM),  # beta
        ],
        out_specs=pl.BlockSpec((H2, L), lambda c, j: (c, j)),
        out_shape=jax.ShapeDtypeStruct((R, Ltot), jnp.float32),
        compiler_params=pltpu.CompilerParams(
            dimension_semantics=("parallel", "arbitrary")),
    )(conv, rsum, rsq, gamma_s, beta_s)

    # (R, N_pad*W2) -> (N, C_out, H2, W2)   (drop batch padding)
    out = y.reshape(C_out, H2, N_pad, W2).transpose(2, 0, 1, 3)[:N]
    return out


# ---------------------------------------------------------------------------
# Pure-JAX reference (same semantics, includes the bias) for a sanity check.
# ---------------------------------------------------------------------------
def _reference(x, w, bias, gamma, beta):
    N, C_in, H, W = x.shape
    H2, W2 = 2 * H, 2 * W
    Uh = jnp.asarray(_bilinear_matrix(H2, H))
    Uw = jnp.asarray(_bilinear_matrix(W2, W))
    up = jnp.einsum('hp,ncpq,wq->nchw', Uh, x, Uw)
    conv = jax.lax.conv_general_dilated(
        up, w, window_strides=(1, 1), padding=((1, 1), (1, 1)),
        dimension_numbers=('NCHW', 'OIHW', 'NCHW'))
    conv = conv + bias[None, :, None, None]
    mean = conv.mean(axis=(0, 2, 3), keepdims=True)
    var = ((conv - mean) ** 2).mean(axis=(0, 2, 3), keepdims=True)
    y = (conv - mean) * jax.lax.rsqrt(var + EPS)
    y = y * gamma[None, :, None, None] + beta[None, :, None, None]
    return jnp.maximum(y, 0.0)


if __name__ == "__main__":
    key = jax.random.PRNGKey(0)
    kx, kw, kb, kg, kbt = jax.random.split(key, 5)
    N, C_in, C_out, H, W = 2, 4, 8, 16, 16

    x = jax.random.normal(kx, (N, C_in, H, W), jnp.float32)
    w = 0.2 * jax.random.normal(kw, (C_out, C_in, 3, 3), jnp.float32)
    bias = 0.1 * jax.random.normal(kb, (C_out,), jnp.float32)
    gamma = 1.0 + 0.3 * jax.random.normal(kg, (C_out,), jnp.float32)
    beta = 0.1 * jax.random.normal(kbt, (C_out,), jnp.float32)

    out = upconv_forward(x, w, bias, gamma, beta)
    out = jax.block_until_ready(out)
    assert out.shape == (N, C_out, 2 * H, 2 * W), out.shape

    ref = _reference(x, w, bias, gamma, beta)
    # Tolerance accounts for bf16 matmul operands (accumulation / BN are f32).
    if not np.allclose(np.asarray(out), np.asarray(ref), atol=3e-2, rtol=3e-2):
        err = float(jnp.max(jnp.abs(out - ref)))
        raise AssertionError(f"kernel mismatch vs reference, max abs err {err}")

    print("KERNEL_OK")
</pallas_src>

<mosaic_0001>
module attributes {stable_mosaic.version = 11 : i64} {
  func.func @_conv_kernel(%arg0: i32, %arg1: i32, %arg2: memref<64x128xbf16, #tpu.memory_space<vmem>>, %arg3: memref<128x768xbf16, #tpu.memory_space<vmem>>, %arg4: memref<256x192xbf16, #tpu.memory_space<vmem>>, %arg5: memref<256x256xf32, #tpu.memory_space<vmem>>, %arg6: memref<256x1xf32, #tpu.memory_space<vmem>>, %arg7: memref<256x1xf32, #tpu.memory_space<vmem>>, %arg8: memref<192x256xbf16, #tpu.memory_space<vmem>>) attributes {dimension_semantics = [#tpu.dimension_semantics<parallel>, #tpu.dimension_semantics<arbitrary>], iteration_bounds = array<i64: 1, 1>, scalar_prefetch = 0 : i64, scratch_operands = 1 : i64, tpu.core_type = #tpu.core_type<tc>, window_params = [{transform_indices = @transform_0, window_bounds = array<i64: 64, 128>}, {pipeline_mode = #tpu.pipeline_mode<synchronous>, transform_indices = @transform_1, window_bounds = array<i64: 128, 768>}, {transform_indices = @transform_2, window_bounds = array<i64: 256, 192>}, {transform_indices = @transform_3, window_bounds = array<i64: 256, 256>}, {transform_indices = @transform_4, window_bounds = array<i64: 256, 1>}, {transform_indices = @transform_5, window_bounds = array<i64: 256, 1>}]} {
    %c0 = arith.constant 0 : index
    %c0_0 = arith.constant 0 : index
    %0 = vector.load %arg2[%c0, %c0_0] : memref<64x128xbf16, #tpu.memory_space<vmem>>, vector<64x128xbf16>
    %c0_1 = arith.constant 0 : index
    %c0_2 = arith.constant 0 : index
    %1 = vector.load %arg3[%c0_1, %c0_2] : memref<128x768xbf16, #tpu.memory_space<vmem>>, vector<128x768xbf16>
    %cst = arith.constant dense<0.000000e+00> : vector<64x768xf32>
    %2 = tpu.matmul %0, %1, %cst {dimension_numbers = #tpu.dot_dimension_numbers<[1], [0], [0], [1], [0, 0, 1, 1], [], []>} : vector<64x128xbf16>, vector<128x768xbf16>, vector<64x768xf32> -> vector<64x768xf32>
    %3 = arith.truncf %2 : vector<64x768xf32> to vector<64x768xbf16>
    %4 = vector.extract_strided_slice %3 {offsets = [0, 0], sizes = [64, 256], strides = [1, 1]} : vector<64x768xbf16> to vector<64x256xbf16>
    %c0_3 = arith.constant 0 : index
    %c0_4 = arith.constant 0 : index
    %5 = vector.load %arg8[%c0_3, %c0_4] : memref<192x256xbf16, #tpu.memory_space<vmem>>, vector<64x256xbf16>
    tpu.vector_store %arg8[%c0_3, %c0_4], %4 {strides = array<i32>} : memref<192x256xbf16, #tpu.memory_space<vmem>>, vector<64x256xbf16>,
    %6 = vector.extract_strided_slice %3 {offsets = [0, 256], sizes = [64, 256], strides = [1, 1]} : vector<64x768xbf16> to vector<64x256xbf16>
    %c64 = arith.constant 64 : index
    %c0_5 = arith.constant 0 : index
    %7 = vector.load %arg8[%c64, %c0_5] : memref<192x256xbf16, #tpu.memory_space<vmem>>, vector<64x256xbf16>
    tpu.vector_store %arg8[%c64, %c0_5], %6 {strides = array<i32>} : memref<192x256xbf16, #tpu.memory_space<vmem>>, vector<64x256xbf16>,
    %8 = vector.extract_strided_slice %3 {offsets = [0, 512], sizes = [64, 256], strides = [1, 1]} : vector<64x768xbf16> to vector<64x256xbf16>
    %c128 = arith.constant 128 : index
    %c0_6 = arith.constant 0 : index
    %9 = vector.load %arg8[%c128, %c0_6] : memref<192x256xbf16, #tpu.memory_space<vmem>>, vector<64x256xbf16>
    tpu.vector_store %arg8[%c128, %c0_6], %8 {strides = array<i32>} : memref<192x256xbf16, #tpu.memory_space<vmem>>, vector<64x256xbf16>,
    %c0_7 = arith.constant 0 : index
    %c0_8 = arith.constant 0 : index
    %10 = vector.load %arg4[%c0_7, %c0_8] : memref<256x192xbf16, #tpu.memory_space<vmem>>, vector<256x192xbf16>
    %c0_9 = arith.constant 0 : index
    %c0_10 = arith.constant 0 : index
    %11 = vector.load %arg8[%c0_9, %c0_10] : memref<192x256xbf16, #tpu.memory_space<vmem>>, vector<192x256xbf16>
    %cst_11 = arith.constant dense<0.000000e+00> : vector<256x256xf32>
    %12 = tpu.matmul %10, %11, %cst_11 {dimension_numbers = #tpu.dot_dimension_numbers<[1], [0], [0], [1], [0, 0, 1, 1], [], []>} : vector<256x192xbf16>, vector<192x256xbf16>, vector<256x256xf32> -> vector<256x256xf32>
    %c0_12 = arith.constant 0 : index
    %c0_13 = arith.constant 0 : index
    %13 = vector.load %arg5[%c0_12, %c0_13] : memref<256x256xf32, #tpu.memory_space<vmem>>, vector<256x256xf32>
    tpu.vector_store %arg5[%c0_12, %c0_13], %12 {strides = array<i32>} : memref<256x256xf32, #tpu.memory_space<vmem>>, vector<256x256xf32>,
    %c0_i32 = arith.constant 0 : i32
    %14 = arith.cmpi eq, %arg1, %c0_i32 : i32
    %15 = arith.extui %14 : i1 to i32
    %c0_i32_14 = arith.constant 0 : i32
    %16 = arith.cmpi ne, %15, %c0_i32_14 : i32
    scf.if %16 {
      %cst_25 = arith.constant 0.000000e+00 : f32
      %28 = vector.broadcast %cst_25 : f32 to vector<256x1xf32>
      %c0_26 = arith.constant 0 : index
      %c0_27 = arith.constant 0 : index
      %29 = vector.load %arg6[%c0_26, %c0_27] : memref<256x1xf32, #tpu.memory_space<vmem>>, vector<256x1xf32>
      tpu.vector_store %arg6[%c0_26, %c0_27], %28 {strides = array<i32>} : memref<256x1xf32, #tpu.memory_space<vmem>>, vector<256x1xf32>,
      %cst_28 = arith.constant 0.000000e+00 : f32
      %30 = vector.broadcast %cst_28 : f32 to vector<256x1xf32>
      %c0_29 = arith.constant 0 : index
      %c0_30 = arith.constant 0 : index
      %31 = vector.load %arg7[%c0_29, %c0_30] : memref<256x1xf32, #tpu.memory_space<vmem>>, vector<256x1xf32>
      tpu.vector_store %arg7[%c0_29, %c0_30], %30 {strides = array<i32>} : memref<256x1xf32, #tpu.memory_space<vmem>>, vector<256x1xf32>,
    } else {
    }
    %c0_15 = arith.constant 0 : index
    %c0_16 = arith.constant 0 : index
    %17 = vector.load %arg6[%c0_15, %c0_16] : memref<256x1xf32, #tpu.memory_space<vmem>>, vector<256x1xf32>
    %cst_17 = arith.constant dense<0.000000e+00> : vector<256xf32>
    %18 = vector.multi_reduction <add>, %12, %cst_17 [1] : vector<256x256xf32> to vector<256xf32>
    %19 = vector.shape_cast %18 : vector<256xf32> to vector<256x1xf32>
    %20 = arith.addf %17, %19 : vector<256x1xf32>
    %c0_18 = arith.constant 0 : index
    %c0_19 = arith.constant 0 : index
    %21 = vector.load %arg6[%c0_18, %c0_19] : memref<256x1xf32, #tpu.memory_space<vmem>>, vector<256x1xf32>
    tpu.vector_store %arg6[%c0_18, %c0_19], %20 {strides = array<i32>} : memref<256x1xf32, #tpu.memory_space<vmem>>, vector<256x1xf32>,
    %c0_20 = arith.constant 0 : index
    %c0_21 = arith.constant 0 : index
    %22 = vector.load %arg7[%c0_20, %c0_21] : memref<256x1xf32, #tpu.memory_space<vmem>>, vector<256x1xf32>
    %23 = arith.mulf %12, %12 : vector<256x256xf32>
    %cst_22 = arith.constant dense<0.000000e+00> : vector<256xf32>
    %24 = vector.multi_reduction <add>, %23, %cst_22 [1] : vector<256x256xf32> to vector<256xf32>
    %25 = vector.shape_cast %24 : vector<256xf32> to vector<256x1xf32>
    %26 = arith.addf %22, %25 : vector<256x1xf32>
    %c0_23 = arith.constant 0 : index
    %c0_24 = arith.constant 0 : index
    %27 = vector.load %arg7[%c0_23, %c0_24] : memref<256x1xf32, #tpu.memory_space<vmem>>, vector<256x1xf32>
    tpu.vector_store %arg7[%c0_23, %c0_24], %26 {strides = array<i32>} : memref<256x1xf32, #tpu.memory_space<vmem>>, vector<256x1xf32>,
    return
  }
  func.func @transform_0(%arg0: i32, %arg1: i32) -> (i32, i32) {
    %c0_i32 = arith.constant 0 : i32
    %c0_i32_0 = arith.constant 0 : i32
    return %c0_i32, %arg1 : i32, i32
  }
  func.func @transform_1(%arg0: i32, %arg1: i32) -> (i32, i32) {
    %c0_i32 = arith.constant 0 : i32
    %c0_i32_0 = arith.constant 0 : i32
    %c0_i32_1 = arith.constant 0 : i32
    return %c0_i32, %c0_i32_0 : i32, i32
  }
  func.func @transform_2(%arg0: i32, %arg1: i32) -> (i32, i32) {
    %c0_i32 = arith.constant 0 : i32
    %c0_i32_0 = arith.constant 0 : i32
    return %arg0, %c0_i32 : i32, i32
  }
  func.func @transform_3(%arg0: i32, %arg1: i32) -> (i32, i32) {
    %c0_i32 = arith.constant 0 : i32
    return %arg0, %arg1 : i32, i32
  }
  func.func @transform_4(%arg0: i32, %arg1: i32) -> (i32, i32) {
    %c0_i32 = arith.constant 0 : i32
    %c0_i32_0 = arith.constant 0 : i32
    return %arg0, %c0_i32 : i32, i32
  }
  func.func @transform_5(%arg0: i32, %arg1: i32) -> (i32, i32) {
    %c0_i32 = arith.constant 0 : i32
    %c0_i32_0 = arith.constant 0 : i32
    return %arg0, %c0_i32 : i32, i32
  }
}

</mosaic_0001>

<llo_original>
// kernel: tpu_custom_call.1
$region0: #{tpu_custom_call.1}
  #allocation0 [shape = 'u32[]', space=smem, size = 0x4, offset = 0x4, fixed_abs, tag = 'smem constant byte address 0x4 - core index']
  #allocation1 [shape = 'u32[72,128]{1,0:T(1,128)}', space=vmem, size = 0x9000, scoped, tag = 'internal scratch']
  #allocation2 [shape = 'bf16[192,256]{1,0:T(8,128)(2,1)}', space=vmem, size = 0x18000, scoped, tag = 'scratch operand']
  %s0 = inlined_call_operand.vmem [shape: bf16[64,128], index: 0, kind: input, shape index: {}]
  %s1 = inlined_call_operand.vmem [shape: bf16[128,768], index: 1, kind: input, shape index: {}]
  %s2 = inlined_call_operand.vmem [shape: bf16[256,192], index: 2, kind: input, shape index: {}]
  %s3 = inlined_call_operand.hbm [shape: f32[256,256], index: 3, kind: output, shape index: {0}]
  %s4 = inlined_call_operand.vmem [shape: f32[256,1], index: 4, kind: output, shape index: {1}]
  %s5 = inlined_call_operand.vmem [shape: f32[256,1], index: 5, kind: output, shape index: {2}]
  %6 = xla_tuple %s3, %s4, %s5
  %s7 = sld [smem:[#allocation0]]
  $region42: #{tpu_custom_call.1} parent=0
    _
  %s9 = ssub.s32 1, %s7
  %s10 = scalar_select 0, %s9, %s7
  $region1: #{tpu_custom_call.1} parent=0
    #allocation3 [shape = 'u8[262144]{0}', space=vmem, size = 0x40000, scoped, tag = 'output window, operand 0, single buffered']
    #allocation4 [shape = 's32[1]{0}', space=sflag, size = 0x4, scoped, tag = 'scoped memory for tpu_custom_call.1']
    %11 = vsyncpa [#allocation4], 0
    // Predicated region
    $region2: #{tpu_custom_call.1} parent=1 // pred_check
      _
    $region3: #{tpu_custom_call.1} parent=1 // pred_check_branch
      %13 = sbr.rel (0) target = $region5
    $region4: #{tpu_custom_call.1} parent=1 // pred_region
      _
    $region5: #{tpu_custom_call.1} parent=1 // pred_fallthru
      _
    // Predicated region
    $region6: #{tpu_custom_call.1} parent=1 // pred_check
      _
    $region7: #{tpu_custom_call.1} parent=1 // pred_check_branch
      %15 = sbr.rel (0) target = $region9
    $region8: #{tpu_custom_call.1} parent=1 // pred_region
      _
    $region9: #{tpu_custom_call.1} parent=1 // pred_fallthru
      _
    // Predicated region
    $region10: #{tpu_custom_call.1} parent=1 // pred_check
      _
    $region11: #{tpu_custom_call.1} parent=1 // pred_check_branch
      %17 = sbr.rel (0) target = $region13
    $region12: #{tpu_custom_call.1} parent=1 // pred_region
      _
    $region13: #{tpu_custom_call.1} parent=1 // pred_fallthru
      _
    %v19 = vld [vmem:[%s0] sm:$0xf]
    %v20 = vld [vmem:[%s0 + $0x4] sm:$0xf]
    %v21 = vld [vmem:[%s0 + $0x8] sm:$0xf]
    %v22 = vld [vmem:[%s0 + $0xc] sm:$0xf]
    %v23 = vld [vmem:[%s0 + $0x10] sm:$0xf]
    %v24 = vld [vmem:[%s0 + $0x14] sm:$0xf]
    %v25 = vld [vmem:[%s0 + $0x18] sm:$0xf]
    %v26 = vld [vmem:[%s0 + $0x1c] sm:$0xf]
    %v27 = vld [vmem:[%s1] sm:$0xff]
    %v28 = vld [vmem:[%s1 + $0x8] sm:$0xff]
    %v29 = vld [vmem:[%s1 + $0x10] sm:$0xff]
    %v30 = vld [vmem:[%s1 + $0x18] sm:$0xff]
    %v31 = vld [vmem:[%s1 + $0x20] sm:$0xff]
    %v32 = vld [vmem:[%s1 + $0x28] sm:$0xff]
    %v33 = vld [vmem:[%s1 + $0x30] sm:$0xff]
    %v34 = vld [vmem:[%s1 + $0x38] sm:$0xff]
    %v35 = vld [vmem:[%s1 + $0x40] sm:$0xff]
    %v36 = vld [vmem:[%s1 + $0x48] sm:$0xff]
    %v37 = vld [vmem:[%s1 + $0x50] sm:$0xff]
    %v38 = vld [vmem:[%s1 + $0x58] sm:$0xff]
    %v39 = vld [vmem:[%s1 + $0x60] sm:$0xff]
    %v40 = vld [vmem:[%s1 + $0x68] sm:$0xff]
    %v41 = vld [vmem:[%s1 + $0x70] sm:$0xff]
    %v42 = vld [vmem:[%s1 + $0x78] sm:$0xff]
    %v43 = vld [vmem:[%s1 + $0x80] sm:$0xff]
    %v44 = vld [vmem:[%s1 + $0x88] sm:$0xff]
    %v45 = vld [vmem:[%s1 + $0x90] sm:$0xff]
    %v46 = vld [vmem:[%s1 + $0x98] sm:$0xff]
    %v47 = vld [vmem:[%s1 + $0xa0] sm:$0xff]
    %v48 = vld [vmem:[%s1 + $0xa8] sm:$0xff]
    %v49 = vld [vmem:[%s1 + $0xb0] sm:$0xff]
    %v50 = vld [vmem:[%s1 + $0xb8] sm:$0xff]
    %v51 = vld [vmem:[%s1 + $0xc0] sm:$0xff]
    %v52 = vld [vmem:[%s1 + $0xc8] sm:$0xff]
    %v53 = vld [vmem:[%s1 + $0xd0] sm:$0xff]
    %v54 = vld [vmem:[%s1 + $0xd8] sm:$0xff]
    %v55 = vld [vmem:[%s1 + $0xe0] sm:$0xff]
    %v56 = vld [vmem:[%s1 + $0xe8] sm:$0xff]
    %v57 = vld [vmem:[%s1 + $0xf0] sm:$0xff]
    %v58 = vld [vmem:[%s1 + $0xf8] sm:$0xff]
    %v59 = vld [vmem:[%s1 + $0x100] sm:$0xff]
    %v60 = vld [vmem:[%s1 + $0x108] sm:$0xff]
    %v61 = vld [vmem:[%s1 + $0x110] sm:$0xff]
    %v62 = vld [vmem:[%s1 + $0x118] sm:$0xff]
    %v63 = vld [vmem:[%s1 + $0x120] sm:$0xff]
    %v64 = vld [vmem:[%s1 + $0x128] sm:$0xff]
    %v65 = vld [vmem:[%s1 + $0x130] sm:$0xff]
    %v66 = vld [vmem:[%s1 + $0x138] sm:$0xff]
    %v67 = vld [vmem:[%s1 + $0x140] sm:$0xff]
    %v68 = vld [vmem:[%s1 + $0x148] sm:$0xff]
    %v69 = vld [vmem:[%s1 + $0x150] sm:$0xff]
    %v70 = vld [vmem:[%s1 + $0x158] sm:$0xff]
    %v71 = vld [vmem:[%s1 + $0x160] sm:$0xff]
    %v72 = vld [vmem:[%s1 + $0x168] sm:$0xff]
    %v73 = vld [vmem:[%s1 + $0x170] sm:$0xff]
    %v74 = vld [vmem:[%s1 + $0x178] sm:$0xff]
    %v83 = vunpack.c.l.b16 %v19
    %v84 = vunpack.c.l.b16 %v20
    %v85 = vunpack.c.l.b16 %v21
    %v86 = vunpack.c.l.b16 %v22
    %v87 = vunpack.c.l.b16 %v23
    %v88 = vunpack.c.l.b16 %v24
    %v89 = vunpack.c.l.b16 %v25
    %v90 = vunpack.c.l.b16 %v26
    %v91 = vpack.c.b16 %v84, %v83
    %v92 = vpack.c.b16 %v86, %v85
    %v93 = vpack.c.b16 %v88, %v87
    %v94 = vpack.c.b16 %v90, %v89
    %v147 = vunpack.c.l.b16 %v27
    %v148 = vunpack.c.h.b16 %v27
    %v149 = vunpack.c.l.b16 %v28
    %v150 = vunpack.c.h.b16 %v28
    %v151 = vunpack.c.l.b16 %v29
    %v152 = vunpack.c.h.b16 %v29
    %v153 = vunpack.c.l.b16 %v30
    %v154 = vunpack.c.h.b16 %v30
    %v155 = vunpack.c.l.b16 %v31
    %v156 = vunpack.c.h.b16 %v31
    %v157 = vunpack.c.l.b16 %v32
    %v158 = vunpack.c.h.b16 %v32
    %v159 = vunpack.c.l.b16 %v33
    %v160 = vunpack.c.h.b16 %v33
    %v161 = vunpack.c.l.b16 %v34
    %v162 = vunpack.c.h.b16 %v34
    %v163 = vunpack.c.l.b16 %v35
    %v164 = vunpack.c.h.b16 %v35
    %v165 = vunpack.c.l.b16 %v36
    %v166 = vunpack.c.h.b16 %v36
    %v167 = vunpack.c.l.b16 %v37
    %v168 = vunpack.c.h.b16 %v37
    %v169 = vunpack.c.l.b16 %v38
    %v170 = vunpack.c.h.b16 %v38
    %v171 = vunpack.c.l.b16 %v39
    %v172 = vunpack.c.h.b16 %v39
    %v173 = vunpack.c.l.b16 %v40
    %v174 = vunpack.c.h.b16 %v40
    %v175 = vunpack.c.l.b16 %v41
    %v176 = vunpack.c.h.b16 %v41
    %v177 = vunpack.c.l.b16 %v42
    %v178 = vunpack.c.h.b16 %v42
    %v179 = vunpack.c.l.b16 %v43
    %v180 = vunpack.c.h.b16 %v43
    %v181 = vunpack.c.l.b16 %v44
    %v182 = vunpack.c.h.b16 %v44
    %v183 = vunpack.c.l.b16 %v45
    %v184 = vunpack.c.h.b16 %v45
    %v185 = vunpack.c.l.b16 %v46
    %v186 = vunpack.c.h.b16 %v46
    %v187 = vunpack.c.l.b16 %v47
    %v188 = vunpack.c.h.b16 %v47
    %v189 = vunpack.c.l.b16 %v48
    %v190 = vunpack.c.h.b16 %v48
    %v191 = vunpack.c.l.b16 %v49
    %v192 = vunpack.c.h.b16 %v49
    %v193 = vunpack.c.l.b16 %v50
    %v194 = vunpack.c.h.b16 %v50
    %v195 = vunpack.c.l.b16 %v51
    %v196 = vunpack.c.h.b16 %v51
    %v197 = vunpack.c.l.b16 %v52
    %v198 = vunpack.c.h.b16 %v52
    %v199 = vunpack.c.l.b16 %v53
    %v200 = vunpack.c.h.b16 %v53
    %v201 = vunpack.c.l.b16 %v54
    %v202 = vunpack.c.h.b16 %v54
    %v203 = vunpack.c.l.b16 %v55
    %v204 = vunpack.c.h.b16 %v55
    %v205 = vunpack.c.l.b16 %v56
    %v206 = vunpack.c.h.b16 %v56
    %v207 = vunpack.c.l.b16 %v57
    %v208 = vunpack.c.h.b16 %v57
    %v209 = vunpack.c.l.b16 %v58
    %v210 = vunpack.c.h.b16 %v58
    %v211 = vunpack.c.l.b16 %v59
    %v212 = vunpack.c.h.b16 %v59
    %v213 = vunpack.c.l.b16 %v60
    %v214 = vunpack.c.h.b16 %v60
    %v215 = vunpack.c.l.b16 %v61
    %v216 = vunpack.c.h.b16 %v61
    %v217 = vunpack.c.l.b16 %v62
    %v218 = vunpack.c.h.b16 %v62
    %v219 = vunpack.c.l.b16 %v63
    %v220 = vunpack.c.h.b16 %v63
    %v221 = vunpack.c.l.b16 %v64
    %v222 = vunpack.c.h.b16 %v64
    %v223 = vunpack.c.l.b16 %v65
    %v224 = vunpack.c.h.b16 %v65
    %v225 = vunpack.c.l.b16 %v66
    %v226 = vunpack.c.h.b16 %v66
    %v227 = vunpack.c.l.b16 %v67
    %v228 = vunpack.c.h.b16 %v67
    %v229 = vunpack.c.l.b16 %v68
    %v230 = vunpack.c.h.b16 %v68
    %v231 = vunpack.c.l.b16 %v69
    %v232 = vunpack.c.h.b16 %v69
    %v233 = vunpack.c.l.b16 %v70
    %v234 = vunpack.c.h.b16 %v70
    %v235 = vunpack.c.l.b16 %v71
    %v236 = vunpack.c.h.b16 %v71
    %v237 = vunpack.c.l.b16 %v72
    %v238 = vunpack.c.h.b16 %v72
    %v239 = vunpack.c.l.b16 %v73
    %v240 = vunpack.c.h.b16 %v73
    %v241 = vunpack.c.l.b16 %v74
    %v242 = vunpack.c.h.b16 %v74
    %v243 = vpack.c.b16 %v153, %v147
    %v244 = vpack.c.b16 %v154, %v148
    %v245 = vpack.c.b16 %v155, %v149
    %v246 = vpack.c.b16 %v156, %v150
    %v247 = vpack.c.b16 %v157, %v151
    %v248 = vpack.c.b16 %v158, %v152
    %v249 = vpack.c.b16 %v165, %v159
    %v250 = vpack.c.b16 %v166, %v160
    %v251 = vpack.c.b16 %v167, %v161
    %v252 = vpack.c.b16 %v168, %v162
    %v253 = vpack.c.b16 %v169, %v163
    %v254 = vpack.c.b16 %v170, %v164
    %v255 = vpack.c.b16 %v177, %v171
    %v256 = vpack.c.b16 %v178, %v172
    %v257 = vpack.c.b16 %v179, %v173
    %v258 = vpack.c.b16 %v180, %v174
    %v259 = vpack.c.b16 %v181, %v175
    %v260 = vpack.c.b16 %v182, %v176
    %v261 = vpack.c.b16 %v189, %v183
    %v262 = vpack.c.b16 %v190, %v184
    %v263 = vpack.c.b16 %v191, %v185
    %v264 = vpack.c.b16 %v192, %v186
    %v265 = vpack.c.b16 %v193, %v187
    %v266 = vpack.c.b16 %v194, %v188
    %v267 = vpack.c.b16 %v201, %v195
    %v268 = vpack.c.b16 %v202, %v196
    %v269 = vpack.c.b16 %v203, %v197
    %v270 = vpack.c.b16 %v204, %v198
    %v271 = vpack.c.b16 %v205, %v199
    %v272 = vpack.c.b16 %v206, %v200
    %v273 = vpack.c.b16 %v213, %v207
    %v274 = vpack.c.b16 %v214, %v208
    %v275 = vpack.c.b16 %v215, %v209
    %v276 = vpack.c.b16 %v216, %v210
    %v277 = vpack.c.b16 %v217, %v211
    %v278 = vpack.c.b16 %v218, %v212
    %v279 = vpack.c.b16 %v225, %v219
    %v280 = vpack.c.b16 %v226, %v220
    %v281 = vpack.c.b16 %v227, %v221
    %v282 = vpack.c.b16 %v228, %v222
    %v283 = vpack.c.b16 %v229, %v223
    %v284 = vpack.c.b16 %v230, %v224
    %v285 = vpack.c.b16 %v237, %v231
    %v286 = vpack.c.b16 %v238, %v232
    %v287 = vpack.c.b16 %v239, %v233
    %v288 = vpack.c.b16 %v240, %v234
    %v289 = vpack.c.b16 %v241, %v235
    %v290 = vpack.c.b16 %v242, %v236
    %339 = vmatpush.bf16.msra.mxu0 %v285
    %340 = vmatpush.bf16.msra.mxu0 %v279
    %341 = vmatpush.bf16.msra.mxu0 %v273
    %342 = vmatpush.bf16.msra.mxu0 %v267
    %343 = vmatpush.bf16.msra.mxu0 %v261
    %344 = vmatpush.bf16.msra.mxu0 %v255
    %345 = vmatpush.bf16.msra.mxu0 %v249
    %346 = vmatpush.bf16.msra.mxu0 %v243
    %347 = vmatmul.bf16.gmra.mxu0 %v91
    %v348 = vpop.f32.mrf.mxu0
    %v349 = vadd.f32 0.0, %v348
    %v350 = vpop.f32.mrf.mxu0
    %v351 = vadd.f32 0.0, %v350
    %352 = vmatmul.bf16.gmra.mxu0 %v92
    %v353 = vpop.f32.mrf.mxu0
    %v354 = vadd.f32 0.0, %v353
    %v355 = vpop.f32.mrf.mxu0
    %v356 = vadd.f32 0.0, %v355
    %357 = vmatmul.bf16.gmra.mxu0 %v93
    %v358 = vpop.f32.mrf.mxu0
    %v359 = vadd.f32 0.0, %v358
    %v360 = vpop.f32.mrf.mxu0
    %v361 = vadd.f32 0.0, %v360
    %362 = vmatmul.bf16.gmra.mxu0 %v94
    %v363 = vpop.f32.mrf.mxu0
    %v364 = vadd.f32 0.0, %v363
    %v365 = vpop.f32.mrf.mxu0
    %v366 = vadd.f32 0.0, %v365
    %367 = vdwg.mxu0
    %368 = vmatpush.bf16.msra.mxu0 %v286
    %369 = vmatpush.bf16.msra.mxu0 %v280
    %370 = vmatpush.bf16.msra.mxu0 %v274
    %371 = vmatpush.bf16.msra.mxu0 %v268
    %372 = vmatpush.bf16.msra.mxu0 %v262
    %373 = vmatpush.bf16.msra.mxu0 %v256
    %374 = vmatpush.bf16.msra.mxu0 %v250
    %375 = vmatpush.bf16.msra.mxu0 %v244
    %376 = vmatmul.bf16.gmra.mxu0 %v91
    %v377 = vpop.f32.mrf.mxu0
    %v378 = vadd.f32 0.0, %v377
    %v379 = vpop.f32.mrf.mxu0
    %v380 = vadd.f32 0.0, %v379
    %381 = vmatmul.bf16.gmra.mxu0 %v92
    %v382 = vpop.f32.mrf.mxu0
    %v383 = vadd.f32 0.0, %v382
    %v384 = vpop.f32.mrf.mxu0
    %v385 = vadd.f32 0.0, %v384
    %386 = vmatmul.bf16.gmra.mxu0 %v93
    %v387 = vpop.f32.mrf.mxu0
    %v388 = vadd.f32 0.0, %v387
    %v389 = vpop.f32.mrf.mxu0
    %v390 = vadd.f32 0.0, %v389
    %391 = vmatmul.bf16.gmra.mxu0 %v94
    %v392 = vpop.f32.mrf.mxu0
    %v393 = vadd.f32 0.0, %v392
    %v394 = vpop.f32.mrf.mxu0
    %v395 = vadd.f32 0.0, %v394
    %396 = vdwg.mxu0
    %397 = vmatpush.bf16.msra.mxu0 %v287
    %398 = vmatpush.bf16.msra.mxu0 %v281
    %399 = vmatpush.bf16.msra.mxu0 %v275
    %400 = vmatpush.bf16.msra.mxu0 %v269
    %401 = vmatpush.bf16.msra.mxu0 %v263
    %402 = vmatpush.bf16.msra.mxu0 %v257
    %403 = vmatpush.bf16.msra.mxu0 %v251
    %404 = vmatpush.bf16.msra.mxu0 %v245
    %405 = vmatmul.bf16.gmra.mxu0 %v91
    %v406 = vpop.f32.mrf.mxu0
    %v407 = vadd.f32 0.0, %v406
    %v408 = vpop.f32.mrf.mxu0
    %v409 = vadd.f32 0.0, %v408
    %410 = vmatmul.bf16.gmra.mxu0 %v92
    %v411 = vpop.f32.mrf.mxu0
    %v412 = vadd.f32 0.0, %v411
    %v413 = vpop.f32.mrf.mxu0
    %v414 = vadd.f32 0.0, %v413
    %415 = vmatmul.bf16.gmra.mxu0 %v93
    %v416 = vpop.f32.mrf.mxu0
    %v417 = vadd.f32 0.0, %v416
    %v418 = vpop.f32.mrf.mxu0
    %v419 = vadd.f32 0.0, %v418
    %420 = vmatmul.bf16.gmra.mxu0 %v94
    %v421 = vpop.f32.mrf.mxu0
    %v422 = vadd.f32 0.0, %v421
    %v423 = vpop.f32.mrf.mxu0
    %v424 = vadd.f32 0.0, %v423
    %425 = vdwg.mxu0
    %426 = vmatpush.bf16.msra.mxu0 %v288
    %427 = vmatpush.bf16.msra.mxu0 %v282
    %428 = vmatpush.bf16.msra.mxu0 %v276
    %429 = vmatpush.bf16.msra.mxu0 %v270
    %430 = vmatpush.bf16.msra.mxu0 %v264
    %431 = vmatpush.bf16.msra.mxu0 %v258
    %432 = vmatpush.bf16.msra.mxu0 %v252
    %433 = vmatpush.bf16.msra.mxu0 %v246
    %434 = vmatmul.bf16.gmra.mxu0 %v91
    %v435 = vpop.f32.mrf.mxu0
    %v436 = vadd.f32 0.0, %v435
    %v437 = vpop.f32.mrf.mxu0
    %v438 = vadd.f32 0.0, %v437
    %439 = vmatmul.bf16.gmra.mxu0 %v92
    %v440 = vpop.f32.mrf.mxu0
    %v441 = vadd.f32 0.0, %v440
    %v442 = vpop.f32.mrf.mxu0
    %v443 = vadd.f32 0.0, %v442
    %444 = vmatmul.bf16.gmra.mxu0 %v93
    %v445 = vpop.f32.mrf.mxu0
    %v446 = vadd.f32 0.0, %v445
    %v447 = vpop.f32.mrf.mxu0
    %v448 = vadd.f32 0.0, %v447
    %449 = vmatmul.bf16.gmra.mxu0 %v94
    %v450 = vpop.f32.mrf.mxu0
    %v451 = vadd.f32 0.0, %v450
    %v452 = vpop.f32.mrf.mxu0
    %v453 = vadd.f32 0.0, %v452
    %454 = vdwg.mxu0
    %455 = vmatpush.bf16.msra.mxu0 %v289
    %456 = vmatpush.bf16.msra.mxu0 %v283
    %457 = vmatpush.bf16.msra.mxu0 %v277
    %458 = vmatpush.bf16.msra.mxu0 %v271
    %459 = vmatpush.bf16.msra.mxu0 %v265
    %460 = vmatpush.bf16.msra.mxu0 %v259
    %461 = vmatpush.bf16.msra.mxu0 %v253
    %462 = vmatpush.bf16.msra.mxu0 %v247
    %463 = vmatmul.bf16.gmra.mxu0 %v91
    %v464 = vpop.f32.mrf.mxu0
    %v465 = vadd.f32 0.0, %v464
    %v466 = vpop.f32.mrf.mxu0
    %v467 = vadd.f32 0.0, %v466
    %468 = vmatmul.bf16.gmra.mxu0 %v92
    %v469 = vpop.f32.mrf.mxu0
    %v470 = vadd.f32 0.0, %v469
    %v471 = vpop.f32.mrf.mxu0
    %v472 = vadd.f32 0.0, %v471
    %473 = vmatmul.bf16.gmra.mxu0 %v93
    %v474 = vpop.f32.mrf.mxu0
    %v475 = vadd.f32 0.0, %v474
    %v476 = vpop.f32.mrf.mxu0
    %v477 = vadd.f32 0.0, %v476
    %478 = vmatmul.bf16.gmra.mxu0 %v94
    %v479 = vpop.f32.mrf.mxu0
    %v480 = vadd.f32 0.0, %v479
    %v481 = vpop.f32.mrf.mxu0
    %v482 = vadd.f32 0.0, %v481
    %483 = vdwg.mxu0
    %484 = vmatpush.bf16.msra.mxu0 %v290
    %485 = vmatpush.bf16.msra.mxu0 %v284
    %486 = vmatpush.bf16.msra.mxu0 %v278
    %487 = vmatpush.bf16.msra.mxu0 %v272
    %488 = vmatpush.bf16.msra.mxu0 %v266
    %489 = vmatpush.bf16.msra.mxu0 %v260
    %490 = vmatpush.bf16.msra.mxu0 %v254
    %491 = vmatpush.bf16.msra.mxu0 %v248
    %492 = vmatmul.bf16.gmra.mxu0 %v91
    %v493 = vpop.f32.mrf.mxu0
    %v494 = vadd.f32 0.0, %v493
    %v495 = vpop.f32.mrf.mxu0
    %v496 = vadd.f32 0.0, %v495
    %497 = vmatmul.bf16.gmra.mxu0 %v92
    %v498 = vpop.f32.mrf.mxu0
    %v499 = vadd.f32 0.0, %v498
    %v500 = vpop.f32.mrf.mxu0
    %v501 = vadd.f32 0.0, %v500
    %502 = vmatmul.bf16.gmra.mxu0 %v93
    %v503 = vpop.f32.mrf.mxu0
    %v504 = vadd.f32 0.0, %v503
    %v505 = vpop.f32.mrf.mxu0
    %v506 = vadd.f32 0.0, %v505
    %507 = vmatmul.bf16.gmra.mxu0 %v94
    %v508 = vpop.f32.mrf.mxu0
    %v509 = vadd.f32 0.0, %v508
    %v510 = vpop.f32.mrf.mxu0
    %v511 = vadd.f32 0.0, %v510
    %512 = vdwg.mxu0
    %v513 = vpack.c.bf16 %v378, %v349
    %v514 = vpack.c.bf16 %v436, %v407
    %v515 = vpack.c.bf16 %v494, %v465
    %v516 = vpack.c.bf16 %v380, %v351
    %v517 = vpack.c.bf16 %v438, %v409
    %v518 = vpack.c.bf16 %v496, %v467
    %v519 = vpack.c.bf16 %v383, %v354
    %v520 = vpack.c.bf16 %v441, %v412
    %v521 = vpack.c.bf16 %v499, %v470
    %v522 = vpack.c.bf16 %v385, %v356
    %v523 = vpack.c.bf16 %v443, %v414
    %v524 = vpack.c.bf16 %v501, %v472
    %v525 = vpack.c.bf16 %v388, %v359
    %v526 = vpack.c.bf16 %v446, %v417
    %v527 = vpack.c.bf16 %v504, %v475
    %v528 = vpack.c.bf16 %v390, %v361
    %v529 = vpack.c.bf16 %v448, %v419
    %v530 = vpack.c.bf16 %v506, %v477
    %v531 = vpack.c.bf16 %v393, %v364
    %v532 = vpack.c.bf16 %v451, %v422
    %v533 = vpack.c.bf16 %v509, %v480
    %v534 = vpack.c.bf16 %v395, %v366
    %v535 = vpack.c.bf16 %v453, %v424
    %v536 = vpack.c.bf16 %v511, %v482
    %537 = vst [vmem:[#allocation2] sm:$0xff] %v513
    %538 = vst [vmem:[#allocation2 + $0x8] sm:$0xff] %v516
    %539 = vst [vmem:[#allocation2 + $0x10] sm:$0xff] %v519
    %540 = vst [vmem:[#allocation2 + $0x18] sm:$0xff] %v522
    %541 = vst [vmem:[#allocation2 + $0x20] sm:$0xff] %v525
    %542 = vst [vmem:[#allocation2 + $0x28] sm:$0xff] %v528
    %543 = vst [vmem:[#allocation2 + $0x30] sm:$0xff] %v531
    %544 = vst [vmem:[#allocation2 + $0x38] sm:$0xff] %v534
    %545 = vst [vmem:[#allocation2 + $0x40] sm:$0xff] %v514
    %546 = vst [vmem:[#allocation2 + $0x48] sm:$0xff] %v517
    %547 = vst [vmem:[#allocation2 + $0x50] sm:$0xff] %v520
    %548 = vst [vmem:[#allocation2 + $0x58] sm:$0xff] %v523
    %549 = vst [vmem:[#allocation2 + $0x60] sm:$0xff] %v526
    %550 = vst [vmem:[#allocation2 + $0x68] sm:$0xff] %v529
    %551 = vst [vmem:[#allocation2 + $0x70] sm:$0xff] %v532
    %552 = vst [vmem:[#allocation2 + $0x78] sm:$0xff] %v535
    %553 = vst [vmem:[#allocation2 + $0x80] sm:$0xff] %v515
    %554 = vst [vmem:[#allocation2 + $0x88] sm:$0xff] %v518
    %555 = vst [vmem:[#allocation2 + $0x90] sm:$0xff] %v521
    %556 = vst [vmem:[#allocation2 + $0x98] sm:$0xff] %v524
    %557 = vst [vmem:[#allocation2 + $0xa0] sm:$0xff] %v527
    %558 = vst [vmem:[#allocation2 + $0xa8] sm:$0xff] %v530
    %559 = vst [vmem:[#allocation2 + $0xb0] sm:$0xff] %v533
    %560 = vst [vmem:[#allocation2 + $0xb8] sm:$0xff] %v536
    %v561 = vld [vmem:[%s2] sm:$0xff]
    %v562 = vld [vmem:[%s2 + $0x8] sm:$0xff]
    %v563 = vld [vmem:[%s2 + $0x10] sm:$0xff]
    %v564 = vld [vmem:[%s2 + $0x18] sm:$0xff]
    %v565 = vld [vmem:[%s2 + $0x20] sm:$0xff]
    %v566 = vld [vmem:[%s2 + $0x28] sm:$0xff]
    %v567 = vld [vmem:[%s2 + $0x30] sm:$0xff]
    %v568 = vld [vmem:[%s2 + $0x38] sm:$0xff]
    %v569 = vld [vmem:[%s2 + $0x40] sm:$0xff]
    %v570 = vld [vmem:[%s2 + $0x48] sm:$0xff]
    %v571 = vld [vmem:[%s2 + $0x50] sm:$0xff]
    %v572 = vld [vmem:[%s2 + $0x58] sm:$0xff]
    %v573 = vld [vmem:[%s2 + $0x60] sm:$0xff]
    %v574 = vld [vmem:[%s2 + $0x68] sm:$0xff]
    %v575 = vld [vmem:[%s2 + $0x70] sm:$0xff]
    %v576 = vld [vmem:[%s2 + $0x78] sm:$0xff]
    %v577 = vld [vmem:[%s2 + $0x80] sm:$0xff]
    %v578 = vld [vmem:[%s2 + $0x88] sm:$0xff]
    %v579 = vld [vmem:[%s2 + $0x90] sm:$0xff]
    %v580 = vld [vmem:[%s2 + $0x98] sm:$0xff]
    %v581 = vld [vmem:[%s2 + $0xa0] sm:$0xff]
    %v582 = vld [vmem:[%s2 + $0xa8] sm:$0xff]
    %v583 = vld [vmem:[%s2 + $0xb0] sm:$0xff]
    %v584 = vld [vmem:[%s2 + $0xb8] sm:$0xff]
    %v585 = vld [vmem:[%s2 + $0xc0] sm:$0xff]
    %v586 = vld [vmem:[%s2 + $0xc8] sm:$0xff]
    %v587 = vld [vmem:[%s2 + $0xd0] sm:$0xff]
    %v588 = vld [vmem:[%s2 + $0xd8] sm:$0xff]
    %v589 = vld [vmem:[%s2 + $0xe0] sm:$0xff]
    %v590 = vld [vmem:[%s2 + $0xe8] sm:$0xff]
    %v591 = vld [vmem:[%s2 + $0xf0] sm:$0xff]
    %v592 = vld [vmem:[%s2 + $0xf8] sm:$0xff]
    %v593 = vld [vmem:[#allocation2] sm:$0xff]
    %v594 = vld [vmem:[#allocation2 + $0x8] sm:$0xff]
    %v595 = vld [vmem:[#allocation2 + $0x10] sm:$0xff]
    %v596 = vld [vmem:[#allocation2 + $0x18] sm:$0xff]
    %v597 = vld [vmem:[#allocation2 + $0x20] sm:$0xff]
    %v598 = vld [vmem:[#allocation2 + $0x28] sm:$0xff]
    %v599 = vld [vmem:[#allocation2 + $0x30] sm:$0xff]
    %v600 = vld [vmem:[#allocation2 + $0x38] sm:$0xff]
    %v601 = vld [vmem:[#allocation2 + $0x40] sm:$0xff]
    %v602 = vld [vmem:[#allocation2 + $0x48] sm:$0xff]
    %v603 = vld [vmem:[#allocation2 + $0x50] sm:$0xff]
    %v604 = vld [vmem:[#allocation2 + $0x58] sm:$0xff]
    %v605 = vld [vmem:[#allocation2 + $0x60] sm:$0xff]
    %v606 = vld [vmem:[#allocation2 + $0x68] sm:$0xff]
    %v607 = vld [vmem:[#allocation2 + $0x70] sm:$0xff]
    %v608 = vld [vmem:[#allocation2 + $0x78] sm:$0xff]
    %v609 = vld [vmem:[#allocation2 + $0x80] sm:$0xff]
    %v610 = vld [vmem:[#allocation2 + $0x88] sm:$0xff]
    %v611 = vld [vmem:[#allocation2 + $0x90] sm:$0xff]
    %v612 = vld [vmem:[#allocation2 + $0x98] sm:$0xff]
    %v613 = vld [vmem:[#allocation2 + $0xa0] sm:$0xff]
    %v614 = vld [vmem:[#allocation2 + $0xa8] sm:$0xff]
    %v615 = vld [vmem:[#allocation2 + $0xb0] sm:$0xff]
    %v616 = vld [vmem:[#allocation2 + $0xb8] sm:$0xff]
    %v649 = vunpack.c.l.b16 %v561
    %v650 = vunpack.c.h.b16 %v561
    %v651 = vunpack.c.l.b16 %v562
    %v652 = vunpack.c.h.b16 %v562
    %v653 = vunpack.c.l.b16 %v563
    %v654 = vunpack.c.h.b16 %v563
    %v655 = vunpack.c.l.b16 %v564
    %v656 = vunpack.c.h.b16 %v564
    %v657 = vunpack.c.l.b16 %v565
    %v658 = vunpack.c.h.b16 %v565
    %v659 = vunpack.c.l.b16 %v566
    %v660 = vunpack.c.h.b16 %v566
    %v661 = vunpack.c.l.b16 %v567
    %v662 = vunpack.c.h.b16 %v567
    %v663 = vunpack.c.l.b16 %v568
    %v664 = vunpack.c.h.b16 %v568
    %v665 = vunpack.c.l.b16 %v569
    %v666 = vunpack.c.h.b16 %v569
    %v667 = vunpack.c.l.b16 %v570
    %v668 = vunpack.c.h.b16 %v570
    %v669 = vunpack.c.l.b16 %v571
    %v670 = vunpack.c.h.b16 %v571
    %v671 = vunpack.c.l.b16 %v572
    %v672 = vunpack.c.h.b16 %v572
    %v673 = vunpack.c.l.b16 %v573
    %v674 = vunpack.c.h.b16 %v573
    %v675 = vunpack.c.l.b16 %v574
    %v676 = vunpack.c.h.b16 %v574
    %v677 = vunpack.c.l.b16 %v575
    %v678 = vunpack.c.h.b16 %v575
    %v679 = vunpack.c.l.b16 %v576
    %v680 = vunpack.c.h.b16 %v576
    %v681 = vunpack.c.l.b16 %v577
    %v682 = vunpack.c.h.b16 %v577
    %v683 = vunpack.c.l.b16 %v578
    %v684 = vunpack.c.h.b16 %v578
    %v685 = vunpack.c.l.b16 %v579
    %v686 = vunpack.c.h.b16 %v579
    %v687 = vunpack.c.l.b16 %v580
    %v688 = vunpack.c.h.b16 %v580
    %v689 = vunpack.c.l.b16 %v581
    %v690 = vunpack.c.h.b16 %v581
    %v691 = vunpack.c.l.b16 %v582
    %v692 = vunpack.c.h.b16 %v582
    %v693 = vunpack.c.l.b16 %v583
    %v694 = vunpack.c.h.b16 %v583
    %v695 = vunpack.c.l.b16 %v584
    %v696 = vunpack.c.h.b16 %v584
    %v697 = vunpack.c.l.b16 %v585
    %v698 = vunpack.c.h.b16 %v585
    %v699 = vunpack.c.l.b16 %v586
    %v700 = vunpack.c.h.b16 %v586
    %v701 = vunpack.c.l.b16 %v587
    %v702 = vunpack.c.h.b16 %v587
    %v703 = vunpack.c.l.b16 %v588
    %v704 = vunpack.c.h.b16 %v588
    %v705 = vunpack.c.l.b16 %v589
    %v706 = vunpack.c.h.b16 %v589
    %v707 = vunpack.c.l.b16 %v590
    %v708 = vunpack.c.h.b16 %v590
    %v709 = vunpack.c.l.b16 %v591
    %v710 = vunpack.c.h.b16 %v591
    %v711 = vunpack.c.l.b16 %v592
    %v712 = vunpack.c.h.b16 %v592
    %v713 = vpack.c.b16 %v651, %v649
    %v714 = vpack.c.b16 %v652, %v650
    %v715 = vpack.c.b16 %v655, %v653
    %v716 = vpack.c.b16 %v656, %v654
    %v717 = vpack.c.b16 %v659, %v657
    %v718 = vpack.c.b16 %v660, %v658
    %v719 = vpack.c.b16 %v663, %v661
    %v720 = vpack.c.b16 %v664, %v662
    %v721 = vpack.c.b16 %v667, %v665
    %v722 = vpack.c.b16 %v668, %v666
    %v723 = vpack.c.b16 %v671, %v669
    %v724 = vpack.c.b16 %v672, %v670
    %v725 = vpack.c.b16 %v675, %v673
    %v726 = vpack.c.b16 %v676, %v674
    %v727 = vpack.c.b16 %v679, %v677
    %v728 = vpack.c.b16 %v680, %v678
    %v729 = vpack.c.b16 %v683, %v681
    %v730 = vpack.c.b16 %v684, %v682
    %v731 = vpack.c.b16 %v687, %v685
    %v732 = vpack.c.b16 %v688, %v686
    %v733 = vpack.c.b16 %v691, %v689
    %v734 = vpack.c.b16 %v692, %v690
    %v735 = vpack.c.b16 %v695, %v693
    %v736 = vpack.c.b16 %v696, %v694
    %v737 = vpack.c.b16 %v699, %v697
    %v738 = vpack.c.b16 %v700, %v698
    %v739 = vpack.c.b16 %v703, %v701
    %v740 = vpack.c.b16 %v704, %v702
    %v741 = vpack.c.b16 %v707, %v705
    %v742 = vpack.c.b16 %v708, %v706
    %v743 = vpack.c.b16 %v711, %v709
    %v744 = vpack.c.b16 %v712, %v710
    %v785 = vunpack.c.l.b16 %v593
    %v786 = vunpack.c.h.b16 %v593
    %v787 = vunpack.c.l.b16 %v594
    %v788 = vunpack.c.h.b16 %v594
    %v789 = vunpack.c.l.b16 %v595
    %v790 = vunpack.c.h.b16 %v595
    %v791 = vunpack.c.l.b16 %v596
    %v792 = vunpack.c.h.b16 %v596
    %v793 = vunpack.c.l.b16 %v597
    %v794 = vunpack.c.h.b16 %v597
    %v795 = vunpack.c.l.b16 %v598
    %v796 = vunpack.c.h.b16 %v598
    %v797 = vunpack.c.l.b16 %v599
    %v798 = vunpack.c.h.b16 %v599
    %v799 = vunpack.c.l.b16 %v600
    %v800 = vunpack.c.h.b16 %v600
    %v801 = vunpack.c.l.b16 %v601
    %v802 = vunpack.c.h.b16 %v601
    %v803 = vunpack.c.l.b16 %v602
    %v804 = vunpack.c.h.b16 %v602
    %v805 = vunpack.c.l.b16 %v603
    %v806 = vunpack.c.h.b16 %v603
    %v807 = vunpack.c.l.b16 %v604
    %v808 = vunpack.c.h.b16 %v604
    %v809 = vunpack.c.l.b16 %v605
    %v810 = vunpack.c.h.b16 %v605
    %v811 = vunpack.c.l.b16 %v606
    %v812 = vunpack.c.h.b16 %v606
    %v813 = vunpack.c.l.b16 %v607
    %v814 = vunpack.c.h.b16 %v607
    %v815 = vunpack.c.l.b16 %v608
    %v816 = vunpack.c.h.b16 %v608
    %v817 = vunpack.c.l.b16 %v609
    %v818 = vunpack.c.h.b16 %v609
    %v819 = vunpack.c.l.b16 %v610
    %v820 = vunpack.c.h.b16 %v610
    %v821 = vunpack.c.l.b16 %v611
    %v822 = vunpack.c.h.b16 %v611
    %v823 = vunpack.c.l.b16 %v612
    %v824 = vunpack.c.h.b16 %v612
    %v825 = vunpack.c.l.b16 %v613
    %v826 = vunpack.c.h.b16 %v613
    %v827 = vunpack.c.l.b16 %v614
    %v828 = vunpack.c.h.b16 %v614
    %v829 = vunpack.c.l.b16 %v615
    %v830 = vunpack.c.h.b16 %v615
    %v831 = vunpack.c.l.b16 %v616
    %v832 = vunpack.c.h.b16 %v616
    %v833 = vpack.c.b16 %v787, %v785
    %v834 = vpack.c.b16 %v788, %v786
    %v835 = vpack.c.b16 %v791, %v789
    %v836 = vpack.c.b16 %v792, %v790
    %v837 = vpack.c.b16 %v795, %v793
    %v838 = vpack.c.b16 %v796, %v794
    %v839 = vpack.c.b16 %v799, %v797
    %v840 = vpack.c.b16 %v800, %v798
    %v841 = vpack.c.b16 %v803, %v801
    %v842 = vpack.c.b16 %v804, %v802
    %v843 = vpack.c.b16 %v807, %v805
    %v844 = vpack.c.b16 %v808, %v806
    %v845 = vpack.c.b16 %v811, %v809
    %v846 = vpack.c.b16 %v812, %v810
    %v847 = vpack.c.b16 %v815, %v813
    %v848 = vpack.c.b16 %v816, %v814
    %v849 = vpack.c.b16 %v819, %v817
    %v850 = vpack.c.b16 %v820, %v818
    %v851 = vpack.c.b16 %v823, %v821
    %v852 = vpack.c.b16 %v824, %v822
    %v853 = vpack.c.b16 %v827, %v825
    %v854 = vpack.c.b16 %v828, %v826
    %v855 = vpack.c.b16 %v831, %v829
    %v856 = vpack.c.b16 %v832, %v830
    %vm881 = vcmask 523264
    %v883 = vsel %vm881, %v714, 0
    %v886 = vsel %vm881, %v716, 0
    %v889 = vsel %vm881, %v718, 0
    %v892 = vsel %vm881, %v720, 0
    %v895 = vsel %vm881, %v722, 0
    %v898 = vsel %vm881, %v724, 0
    %v901 = vsel %vm881, %v726, 0
    %v904 = vsel %vm881, %v728, 0
    %v907 = vsel %vm881, %v730, 0
    %v910 = vsel %vm881, %v732, 0
    %v913 = vsel %vm881, %v734, 0
    %v916 = vsel %vm881, %v736, 0
    %v919 = vsel %vm881, %v738, 0
    %v922 = vsel %vm881, %v740, 0
    %v925 = vsel %vm881, %v742, 0
    %v928 = vsel %vm881, %v744, 0
    %930 = vmatpush.bf16.msra.mxu0 %v847
    %931 = vmatpush.bf16.msra.mxu0 %v845
    %932 = vmatpush.bf16.msra.mxu0 %v843
    %933 = vmatpush.bf16.msra.mxu0 %v841
    %934 = vmatpush.bf16.msra.mxu0 %v839
    %935 = vmatpush.bf16.msra.mxu0 %v837
    %936 = vmatpush.bf16.msra.mxu0 %v835
    %937 = vmatpush.bf16.msra.mxu0 %v833
    %938 = vmatmul.bf16.gmra.mxu0 %v713
    %v939 = vpop.f32.mrf.mxu0
    %v940 = vadd.f32 0.0, %v939
    %v941 = vpop.f32.mrf.mxu0
    %v942 = vadd.f32 0.0, %v941
    %943 = vmatmul.bf16.gmra.mxu0 %v715
    %v944 = vpop.f32.mrf.mxu0
    %v945 = vadd.f32 0.0, %v944
    %v946 = vpop.f32.mrf.mxu0
    %v947 = vadd.f32 0.0, %v946
    %948 = vmatmul.bf16.gmra.mxu0 %v717
    %v949 = vpop.f32.mrf.mxu0
    %v950 = vadd.f32 0.0, %v949
    %v951 = vpop.f32.mrf.mxu0
    %v952 = vadd.f32 0.0, %v951
    %953 = vmatmul.bf16.gmra.mxu0 %v719
    %v954 = vpop.f32.mrf.mxu0
    %v955 = vadd.f32 0.0, %v954
    %v956 = vpop.f32.mrf.mxu0
    %v957 = vadd.f32 0.0, %v956
    %958 = vmatmul.bf16.gmra.mxu0 %v721
    %v959 = vpop.f32.mrf.mxu0
    %v960 = vadd.f32 0.0, %v959
    %v961 = vpop.f32.mrf.mxu0
    %v962 = vadd.f32 0.0, %v961
    %963 = vmatmul.bf16.gmra.mxu0 %v723
    %v964 = vpop.f32.mrf.mxu0
    %v965 = vadd.f32 0.0, %v964
    %v966 = vpop.f32.mrf.mxu0
    %v967 = vadd.f32 0.0, %v966
    %968 = vmatmul.bf16.gmra.mxu0 %v725
    %v969 = vpop.f32.mrf.mxu0
    %v970 = vadd.f32 0.0, %v969
    %v971 = vpop.f32.mrf.mxu0
    %v972 = vadd.f32 0.0, %v971
    %973 = vmatmul.bf16.gmra.mxu0 %v727
    %v974 = vpop.f32.mrf.mxu0
    %v975 = vadd.f32 0.0, %v974
    %v976 = vpop.f32.mrf.mxu0
    %v977 = vadd.f32 0.0, %v976
    %978 = vmatmul.bf16.gmra.mxu0 %v729
    %v979 = vpop.f32.mrf.mxu0
    %v980 = vadd.f32 0.0, %v979
    %v981 = vpop.f32.mrf.mxu0
    %v982 = vadd.f32 0.0, %v981
    %983 = vmatmul.bf16.gmra.mxu0 %v731
    %v984 = vpop.f32.mrf.mxu0
    %v985 = vadd.f32 0.0, %v984
    %v986 = vpop.f32.mrf.mxu0
    %v987 = vadd.f32 0.0, %v986
    %988 = vmatmul.bf16.gmra.mxu0 %v733
    %v989 = vpop.f32.mrf.mxu0
    %v990 = vadd.f32 0.0, %v989
    %v991 = vpop.f32.mrf.mxu0
    %v992 = vadd.f32 0.0, %v991
    %993 = vmatmul.bf16.gmra.mxu0 %v735
    %v994 = vpop.f32.mrf.mxu0
    %v995 = vadd.f32 0.0, %v994
    %v996 = vpop.f32.mrf.mxu0
    %v997 = vadd.f32 0.0, %v996
    %998 = vmatmul.bf16.gmra.mxu0 %v737
    %v999 = vpop.f32.mrf.mxu0
    %v1000 = vadd.f32 0.0, %v999
    %v1001 = vpop.f32.mrf.mxu0
    %v1002 = vadd.f32 0.0, %v1001
    %1003 = vmatmul.bf16.gmra.mxu0 %v739
    %v1004 = vpop.f32.mrf.mxu0
    %v1005 = vadd.f32 0.0, %v1004
    %v1006 = vpop.f32.mrf.mxu0
    %v1007 = vadd.f32 0.0, %v1006
    %1008 = vmatmul.bf16.gmra.mxu0 %v741
    %v1009 = vpop.f32.mrf.mxu0
    %v1010 = vadd.f32 0.0, %v1009
    %v1011 = vpop.f32.mrf.mxu0
    %v1012 = vadd.f32 0.0, %v1011
    %1013 = vmatmul.bf16.gmra.mxu0 %v743
    %v1014 = vpop.f32.mrf.mxu0
    %v1015 = vadd.f32 0.0, %v1014
    %v1016 = vpop.f32.mrf.mxu0
    %v1017 = vadd.f32 0.0, %v1016
    %1018 = vdwg.mxu0
    %1019 = vmatpush.bf16.msra.mxu0 0
    %1020 = vmatpush.bf16.msra.mxu0 0
    %1021 = vmatpush.bf16.msra.mxu0 0
    %1022 = vmatpush.bf16.msra.mxu0 0
    %1023 = vmatpush.bf16.msra.mxu0 %v855
    %1024 = vmatpush.bf16.msra.mxu0 %v853
    %1025 = vmatpush.bf16.msra.mxu0 %v851
    %1026 = vmatpush.bf16.msra.mxu0 %v849
    %1027 = vmatmul.bf16.gmra.mxu0 %v883
    %v1028 = vpop.f32.mrf.mxu0
    %v1029 = vadd.f32 %v940, %v1028
    %v1030 = vpop.f32.mrf.mxu0
    %v1031 = vadd.f32 %v942, %v1030
    %1032 = vmatmul.bf16.gmra.mxu0 %v886
    %v1033 = vpop.f32.mrf.mxu0
    %v1034 = vadd.f32 %v945, %v1033
    %v1035 = vpop.f32.mrf.mxu0
    %v1036 = vadd.f32 %v947, %v1035
    %1037 = vmatmul.bf16.gmra.mxu0 %v889
    %v1038 = vpop.f32.mrf.mxu0
    %v1039 = vadd.f32 %v950, %v1038
    %v1040 = vpop.f32.mrf.mxu0
    %v1041 = vadd.f32 %v952, %v1040
    %1042 = vmatmul.bf16.gmra.mxu0 %v892
    %v1043 = vpop.f32.mrf.mxu0
    %v1044 = vadd.f32 %v955, %v1043
    %v1045 = vpop.f32.mrf.mxu0
    %v1046 = vadd.f32 %v957, %v1045
    %1047 = vmatmul.bf16.gmra.mxu0 %v895
    %v1048 = vpop.f32.mrf.mxu0
    %v1049 = vadd.f32 %v960, %v1048
    %v1050 = vpop.f32.mrf.mxu0
    %v1051 = vadd.f32 %v962, %v1050
    %1052 = vmatmul.bf16.gmra.mxu0 %v898
    %v1053 = vpop.f32.mrf.mxu0
    %v1054 = vadd.f32 %v965, %v1053
    %v1055 = vpop.f32.mrf.mxu0
    %v1056 = vadd.f32 %v967, %v1055
    %1057 = vmatmul.bf16.gmra.mxu0 %v901
    %v1058 = vpop.f32.mrf.mxu0
    %v1059 = vadd.f32 %v970, %v1058
    %v1060 = vpop.f32.mrf.mxu0
    %v1061 = vadd.f32 %v972, %v1060
    %1062 = vmatmul.bf16.gmra.mxu0 %v904
    %v1063 = vpop.f32.mrf.mxu0
    %v1064 = vadd.f32 %v975, %v1063
    %v1065 = vpop.f32.mrf.mxu0
    %v1066 = vadd.f32 %v977, %v1065
    %1067 = vmatmul.bf16.gmra.mxu0 %v907
    %v1068 = vpop.f32.mrf.mxu0
    %v1069 = vadd.f32 %v980, %v1068
    %v1070 = vpop.f32.mrf.mxu0
    %v1071 = vadd.f32 %v982, %v1070
    %1072 = vmatmul.bf16.gmra.mxu0 %v910
    %v1073 = vpop.f32.mrf.mxu0
    %v1074 = vadd.f32 %v985, %v1073
    %v1075 = vpop.f32.mrf.mxu0
    %v1076 = vadd.f32 %v987, %v1075
    %1077 = vmatmul.bf16.gmra.mxu0 %v913
    %v1078 = vpop.f32.mrf.mxu0
    %v1079 = vadd.f32 %v990, %v1078
    %v1080 = vpop.f32.mrf.mxu0
    %v1081 = vadd.f32 %v992, %v1080
    %1082 = vmatmul.bf16.gmra.mxu0 %v916
    %v1083 = vpop.f32.mrf.mxu0
    %v1084 = vadd.f32 %v995, %v1083
    %v1085 = vpop.f32.mrf.mxu0
    %v1086 = vadd.f32 %v997, %v1085
    %1087 = vmatmul.bf16.gmra.mxu0 %v919
    %v1088 = vpop.f32.mrf.mxu0
    %v1089 = vadd.f32 %v1000, %v1088
    %v1090 = vpop.f32.mrf.mxu0
    %v1091 = vadd.f32 %v1002, %v1090
    %1092 = vmatmul.bf16.gmra.mxu0 %v922
    %v1093 = vpop.f32.mrf.mxu0
    %v1094 = vadd.f32 %v1005, %v1093
    %v1095 = vpop.f32.mrf.mxu0
    %v1096 = vadd.f32 %v1007, %v1095
    %1097 = vmatmul.bf16.gmra.mxu0 %v925
    %v1098 = vpop.f32.mrf.mxu0
    %v1099 = vadd.f32 %v1010, %v1098
    %v1100 = vpop.f32.mrf.mxu0
    %v1101 = vadd.f32 %v1012, %v1100
    %1102 = vmatmul.bf16.gmra.mxu0 %v928
    %v1103 = vpop.f32.mrf.mxu0
    %v1104 = vadd.f32 %v1015, %v1103
    %v1105 = vpop.f32.mrf.mxu0
    %v1106 = vadd.f32 %v1017, %v1105
    %1107 = vdwg.mxu0
    %1108 = vmatpush.bf16.msra.mxu0 %v848
    %1109 = vmatpush.bf16.msra.mxu0 %v846
    %1110 = vmatpush.bf16.msra.mxu0 %v844
    %1111 = vmatpush.bf16.msra.mxu0 %v842
    %1112 = vmatpush.bf16.msra.mxu0 %v840
    %1113 = vmatpush.bf16.msra.mxu0 %v838
    %1114 = vmatpush.bf16.msra.mxu0 %v836
    %1115 = vmatpush.bf16.msra.mxu0 %v834
    %1116 = vmatmul.bf16.gmra.mxu0 %v713
    %v1117 = vpop.f32.mrf.mxu0
    %v1118 = vadd.f32 0.0, %v1117
    %v1119 = vpop.f32.mrf.mxu0
    %v1120 = vadd.f32 0.0, %v1119
    %1121 = vmatmul.bf16.gmra.mxu0 %v715
    %v1122 = vpop.f32.mrf.mxu0
    %v1123 = vadd.f32 0.0, %v1122
    %v1124 = vpop.f32.mrf.mxu0
    %v1125 = vadd.f32 0.0, %v1124
    %1126 = vmatmul.bf16.gmra.mxu0 %v717
    %v1127 = vpop.f32.mrf.mxu0
    %v1128 = vadd.f32 0.0, %v1127
    %v1129 = vpop.f32.mrf.mxu0
    %v1130 = vadd.f32 0.0, %v1129
    %1131 = vmatmul.bf16.gmra.mxu0 %v719
    %v1132 = vpop.f32.mrf.mxu0
    %v1133 = vadd.f32 0.0, %v1132
    %v1134 = vpop.f32.mrf.mxu0
    %v1135 = vadd.f32 0.0, %v1134
    %1136 = vmatmul.bf16.gmra.mxu0 %v721
    %v1137 = vpop.f32.mrf.mxu0
    %v1138 = vadd.f32 0.0, %v1137
    %v1139 = vpop.f32.mrf.mxu0
    %v1140 = vadd.f32 0.0, %v1139
    %1141 = vmatmul.bf16.gmra.mxu0 %v723
    %v1142 = vpop.f32.mrf.mxu0
    %v1143 = vadd.f32 0.0, %v1142
    %v1144 = vpop.f32.mrf.mxu0
    %v1145 = vadd.f32 0.0, %v1144
    %1146 = vmatmul.bf16.gmra.mxu0 %v725
    %v1147 = vpop.f32.mrf.mxu0
    %v1148 = vadd.f32 0.0, %v1147
    %v1149 = vpop.f32.mrf.mxu0
    %v1150 = vadd.f32 0.0, %v1149
    %1151 = vmatmul.bf16.gmra.mxu0 %v727
    %v1152 = vpop.f32.mrf.mxu0
    %v1153 = vadd.f32 0.0, %v1152
    %v1154 = vpop.f32.mrf.mxu0
    %v1155 = vadd.f32 0.0, %v1154
    %1156 = vmatmul.bf16.gmra.mxu0 %v729
    %v1157 = vpop.f32.mrf.mxu0
    %v1158 = vadd.f32 0.0, %v1157
    %v1159 = vpop.f32.mrf.mxu0
    %v1160 = vadd.f32 0.0, %v1159
    %1161 = vmatmul.bf16.gmra.mxu0 %v731
    %v1162 = vpop.f32.mrf.mxu0
    %v1163 = vadd.f32 0.0, %v1162
    %v1164 = vpop.f32.mrf.mxu0
    %v1165 = vadd.f32 0.0, %v1164
    %1166 = vmatmul.bf16.gmra.mxu0 %v733
    %v1167 = vpop.f32.mrf.mxu0
    %v1168 = vadd.f32 0.0, %v1167
    %v1169 = vpop.f32.mrf.mxu0
    %v1170 = vadd.f32 0.0, %v1169
    %1171 = vmatmul.bf16.gmra.mxu0 %v735
    %v1172 = vpop.f32.mrf.mxu0
    %v1173 = vadd.f32 0.0, %v1172
    %v1174 = vpop.f32.mrf.mxu0
    %v1175 = vadd.f32 0.0, %v1174
    %1176 = vmatmul.bf16.gmra.mxu0 %v737
    %v1177 = vpop.f32.mrf.mxu0
    %v1178 = vadd.f32 0.0, %v1177
    %v1179 = vpop.f32.mrf.mxu0
    %v1180 = vadd.f32 0.0, %v1179
    %1181 = vmatmul.bf16.gmra.mxu0 %v739
    %v1182 = vpop.f32.mrf.mxu0
    %v1183 = vadd.f32 0.0, %v1182
    %v1184 = vpop.f32.mrf.mxu0
    %v1185 = vadd.f32 0.0, %v1184
    %1186 = vmatmul.bf16.gmra.mxu0 %v741
    %v1187 = vpop.f32.mrf.mxu0
    %v1188 = vadd.f32 0.0, %v1187
    %v1189 = vpop.f32.mrf.mxu0
    %v1190 = vadd.f32 0.0, %v1189
    %1191 = vmatmul.bf16.gmra.mxu0 %v743
    %v1192 = vpop.f32.mrf.mxu0
    %v1193 = vadd.f32 0.0, %v1192
    %v1194 = vpop.f32.mrf.mxu0
    %v1195 = vadd.f32 0.0, %v1194
    %1196 = vdwg.mxu0
    %1197 = vmatpush.bf16.msra.mxu0 0
    %1198 = vmatpush.bf16.msra.mxu0 0
    %1199 = vmatpush.bf16.msra.mxu0 0
    %1200 = vmatpush.bf16.msra.mxu0 0
    %1201 = vmatpush.bf16.msra.mxu0 %v856
    %1202 = vmatpush.bf16.msra.mxu0 %v854
    %1203 = vmatpush.bf16.msra.mxu0 %v852
    %1204 = vmatpush.bf16.msra.mxu0 %v850
    %1205 = vmatmul.bf16.gmra.mxu0 %v883
    %v1206 = vpop.f32.mrf.mxu0
    %v1207 = vadd.f32 %v1118, %v1206
    %v1208 = vpop.f32.mrf.mxu0
    %v1209 = vadd.f32 %v1120, %v1208
    %1210 = vmatmul.bf16.gmra.mxu0 %v886
    %v1211 = vpop.f32.mrf.mxu0
    %v1212 = vadd.f32 %v1123, %v1211
    %v1213 = vpop.f32.mrf.mxu0
    %v1214 = vadd.f32 %v1125, %v1213
    %1215 = vmatmul.bf16.gmra.mxu0 %v889
    %v1216 = vpop.f32.mrf.mxu0
    %v1217 = vadd.f32 %v1128, %v1216
    %v1218 = vpop.f32.mrf.mxu0
    %v1219 = vadd.f32 %v1130, %v1218
    %1220 = vmatmul.bf16.gmra.mxu0 %v892
    %v1221 = vpop.f32.mrf.mxu0
    %v1222 = vadd.f32 %v1133, %v1221
    %v1223 = vpop.f32.mrf.mxu0
    %v1224 = vadd.f32 %v1135, %v1223
    %1225 = vmatmul.bf16.gmra.mxu0 %v895
    %v1226 = vpop.f32.mrf.mxu0
    %v1227 = vadd.f32 %v1138, %v1226
    %v1228 = vpop.f32.mrf.mxu0
    %v1229 = vadd.f32 %v1140, %v1228
    %1230 = vmatmul.bf16.gmra.mxu0 %v898
    %v1231 = vpop.f32.mrf.mxu0
    %v1232 = vadd.f32 %v1143, %v1231
    %v1233 = vpop.f32.mrf.mxu0
    %v1234 = vadd.f32 %v1145, %v1233
    %1235 = vmatmul.bf16.gmra.mxu0 %v901
    %v1236 = vpop.f32.mrf.mxu0
    %v1237 = vadd.f32 %v1148, %v1236
    %v1238 = vpop.f32.mrf.mxu0
    %v1239 = vadd.f32 %v1150, %v1238
    %1240 = vmatmul.bf16.gmra.mxu0 %v904
    %v1241 = vpop.f32.mrf.mxu0
    %v1242 = vadd.f32 %v1153, %v1241
    %v1243 = vpop.f32.mrf.mxu0
    %v1244 = vadd.f32 %v1155, %v1243
    %1245 = vmatmul.bf16.gmra.mxu0 %v907
    %v1246 = vpop.f32.mrf.mxu0
    %v1247 = vadd.f32 %v1158, %v1246
    %v1248 = vpop.f32.mrf.mxu0
    %v1249 = vadd.f32 %v1160, %v1248
    %1250 = vmatmul.bf16.gmra.mxu0 %v910
    %v1251 = vpop.f32.mrf.mxu0
    %v1252 = vadd.f32 %v1163, %v1251
    %v1253 = vpop.f32.mrf.mxu0
    %v1254 = vadd.f32 %v1165, %v1253
    %1255 = vmatmul.bf16.gmra.mxu0 %v913
    %v1256 = vpop.f32.mrf.mxu0
    %v1257 = vadd.f32 %v1168, %v1256
    %v1258 = vpop.f32.mrf.mxu0
    %v1259 = vadd.f32 %v1170, %v1258
    %1260 = vmatmul.bf16.gmra.mxu0 %v916
    %v1261 = vpop.f32.mrf.mxu0
    %v1262 = vadd.f32 %v1173, %v1261
    %v1263 = vpop.f32.mrf.mxu0
    %v1264 = vadd.f32 %v1175, %v1263
    %1265 = vmatmul.bf16.gmra.mxu0 %v919
    %v1266 = vpop.f32.mrf.mxu0
    %v1267 = vadd.f32 %v1178, %v1266
    %v1268 = vpop.f32.mrf.mxu0
    %v1269 = vadd.f32 %v1180, %v1268
    %1270 = vmatmul.bf16.gmra.mxu0 %v922
    %v1271 = vpop.f32.mrf.mxu0
    %v1272 = vadd.f32 %v1183, %v1271
    %v1273 = vpop.f32.mrf.mxu0
    %v1274 = vadd.f32 %v1185, %v1273
    %1275 = vmatmul.bf16.gmra.mxu0 %v925
    %v1276 = vpop.f32.mrf.mxu0
    %v1277 = vadd.f32 %v1188, %v1276
    %v1278 = vpop.f32.mrf.mxu0
    %v1279 = vadd.f32 %v1190, %v1278
    %1280 = vmatmul.bf16.gmra.mxu0 %v928
    %v1281 = vpop.f32.mrf.mxu0
    %v1282 = vadd.f32 %v1193, %v1281
    %v1283 = vpop.f32.mrf.mxu0
    %v1284 = vadd.f32 %v1195, %v1283
    %1285 = vdwg.mxu0
    %1286 = vst [vmem:[#allocation3] sm:$0xff] %v1029
    %1287 = vst [vmem:[#allocation3 + $0x8] sm:$0xff] %v1207
    %1288 = vst [vmem:[#allocation3 + $0x10] sm:$0xff] %v1031
    %1289 = vst [vmem:[#allocation3 + $0x18] sm:$0xff] %v1209
    %1290 = vst [vmem:[#allocation3 + $0x20] sm:$0xff] %v1034
    %1291 = vst [vmem:[#allocation3 + $0x28] sm:$0xff] %v1212
    %1292 = vst [vmem:[#allocation3 + $0x30] sm:$0xff] %v1036
    %1293 = vst [vmem:[#allocation3 + $0x38] sm:$0xff] %v1214
    %1294 = vst [vmem:[#allocation3 + $0x40] sm:$0xff] %v1039
    %1295 = vst [vmem:[#allocation3 + $0x48] sm:$0xff] %v1217
    %1296 = vst [vmem:[#allocation3 + $0x50] sm:$0xff] %v1041
    %1297 = vst [vmem:[#allocation3 + $0x58] sm:$0xff] %v1219
    %1298 = vst [vmem:[#allocation3 + $0x60] sm:$0xff] %v1044
    %1299 = vst [vmem:[#allocation3 + $0x68] sm:$0xff] %v1222
    %1300 = vst [vmem:[#allocation3 + $0x70] sm:$0xff] %v1046
    %1301 = vst [vmem:[#allocation3 + $0x78] sm:$0xff] %v1224
    %1302 = vst [vmem:[#allocation3 + $0x80] sm:$0xff] %v1049
    %1303 = vst [vmem:[#allocation3 + $0x88] sm:$0xff] %v1227
    %1304 = vst [vmem:[#allocation3 + $0x90] sm:$0xff] %v1051
    %1305 = vst [vmem:[#allocation3 + $0x98] sm:$0xff] %v1229
    %1306 = vst [vmem:[#allocation3 + $0xa0] sm:$0xff] %v1054
    %1307 = vst [vmem:[#allocation3 + $0xa8] sm:$0xff] %v1232
    %1308 = vst [vmem:[#allocation3 + $0xb0] sm:$0xff] %v1056
    %1309 = vst [vmem:[#allocation3 + $0xb8] sm:$0xff] %v1234
    %1310 = vst [vmem:[#allocation3 + $0xc0] sm:$0xff] %v1059
    %1311 = vst [vmem:[#allocation3 + $0xc8] sm:$0xff] %v1237
    %1312 = vst [vmem:[#allocation3 + $0xd0] sm:$0xff] %v1061
    %1313 = vst [vmem:[#allocation3 + $0xd8] sm:$0xff] %v1239
    %1314 = vst [vmem:[#allocation3 + $0xe0] sm:$0xff] %v1064
    %1315 = vst [vmem:[#allocation3 + $0xe8] sm:$0xff] %v1242
    %1316 = vst [vmem:[#allocation3 + $0xf0] sm:$0xff] %v1066
    %1317 = vst [vmem:[#allocation3 + $0xf8] sm:$0xff] %v1244
    %1318 = vst [vmem:[#allocation3 + $0x100] sm:$0xff] %v1069
    %1319 = vst [vmem:[#allocation3 + $0x108] sm:$0xff] %v1247
    %1320 = vst [vmem:[#allocation3 + $0x110] sm:$0xff] %v1071
    %1321 = vst [vmem:[#allocation3 + $0x118] sm:$0xff] %v1249
    %1322 = vst [vmem:[#allocation3 + $0x120] sm:$0xff] %v1074
    %1323 = vst [vmem:[#allocation3 + $0x128] sm:$0xff] %v1252
    %1324 = vst [vmem:[#allocation3 + $0x130] sm:$0xff] %v1076
    %1325 = vst [vmem:[#allocation3 + $0x138] sm:$0xff] %v1254
    %1326 = vst [vmem:[#allocation3 + $0x140] sm:$0xff] %v1079
    %1327 = vst [vmem:[#allocation3 + $0x148] sm:$0xff] %v1257
    %1328 = vst [vmem:[#allocation3 + $0x150] sm:$0xff] %v1081
    %1329 = vst [vmem:[#allocation3 + $0x158] sm:$0xff] %v1259
    %1330 = vst [vmem:[#allocation3 + $0x160] sm:$0xff] %v1084
    %1331 = vst [vmem:[#allocation3 + $0x168] sm:$0xff] %v1262
    %1332 = vst [vmem:[#allocation3 + $0x170] sm:$0xff] %v1086
    %1333 = vst [vmem:[#allocation3 + $0x178] sm:$0xff] %v1264
    %1334 = vst [vmem:[#allocation3 + $0x180] sm:$0xff] %v1089
    %1335 = vst [vmem:[#allocation3 + $0x188] sm:$0xff] %v1267
    %1336 = vst [vmem:[#allocation3 + $0x190] sm:$0xff] %v1091
    %1337 = vst [vmem:[#allocation3 + $0x198] sm:$0xff] %v1269
    %1338 = vst [vmem:[#allocation3 + $0x1a0] sm:$0xff] %v1094
    %1339 = vst [vmem:[#allocation3 + $0x1a8] sm:$0xff] %v1272
    %1340 = vst [vmem:[#allocation3 + $0x1b0] sm:$0xff] %v1096
    %1341 = vst [vmem:[#allocation3 + $0x1b8] sm:$0xff] %v1274
    %1342 = vst [vmem:[#allocation3 + $0x1c0] sm:$0xff] %v1099
    %1343 = vst [vmem:[#allocation3 + $0x1c8] sm:$0xff] %v1277
    %1344 = vst [vmem:[#allocation3 + $0x1d0] sm:$0xff] %v1101
    %1345 = vst [vmem:[#allocation3 + $0x1d8] sm:$0xff] %v1279
    %1346 = vst [vmem:[#allocation3 + $0x1e0] sm:$0xff] %v1104
    %1347 = vst [vmem:[#allocation3 + $0x1e8] sm:$0xff] %v1282
    %1348 = vst [vmem:[#allocation3 + $0x1f0] sm:$0xff] %v1106
    %1349 = vst [vmem:[#allocation3 + $0x1f8] sm:$0xff] %v1284
    %p1350 = scmp.eq.s32.totalorder 0, 0
    // Predicated region
    $region14: #{tpu_custom_call.1} parent=1 // pred_check
      %p1351 = pneg %p1350
    $region15: #{tpu_custom_call.1} parent=1 // pred_check_branch
      %1353 = sbr.rel (%p1351) target = $region17
    $region16: #{tpu_custom_call.1} parent=1 // pred_region
      %vm1354 = vcmask 7168
      %1355 = vst.msk [vmem:[%s4] sm:$0xff] %vm1354, 0.0
      %1356 = vst.msk [vmem:[%s4 + $0x8] sm:$0xff] %vm1354, 0.0
      %1357 = vst.msk [vmem:[%s4 + $0x10] sm:$0xff] %vm1354, 0.0
      %1358 = vst.msk [vmem:[%s4 + $0x18] sm:$0xff] %vm1354, 0.0
      %1359 = vst.msk [vmem:[%s4 + $0x20] sm:$0xff] %vm1354, 0.0
      %1360 = vst.msk [vmem:[%s4 + $0x28] sm:$0xff] %vm1354, 0.0
      %1361 = vst.msk [vmem:[%s4 + $0x30] sm:$0xff] %vm1354, 0.0
      %1362 = vst.msk [vmem:[%s4 + $0x38] sm:$0xff] %vm1354, 0.0
      %1363 = vst.msk [vmem:[%s4 + $0x40] sm:$0xff] %vm1354, 0.0
      %1364 = vst.msk [vmem:[%s4 + $0x48] sm:$0xff] %vm1354, 0.0
      %1365 = vst.msk [vmem:[%s4 + $0x50] sm:$0xff] %vm1354, 0.0
      %1366 = vst.msk [vmem:[%s4 + $0x58] sm:$0xff] %vm1354, 0.0
      %1367 = vst.msk [vmem:[%s4 + $0x60] sm:$0xff] %vm1354, 0.0
      %1368 = vst.msk [vmem:[%s4 + $0x68] sm:$0xff] %vm1354, 0.0
      %1369 = vst.msk [vmem:[%s4 + $0x70] sm:$0xff] %vm1354, 0.0
      %1370 = vst.msk [vmem:[%s4 + $0x78] sm:$0xff] %vm1354, 0.0
      %1371 = vst.msk [vmem:[%s4 + $0x80] sm:$0xff] %vm1354, 0.0
      %1372 = vst.msk [vmem:[%s4 + $0x88] sm:$0xff] %vm1354, 0.0
      %1373 = vst.msk [vmem:[%s4 + $0x90] sm:$0xff] %vm1354, 0.0
      %1374 = vst.msk [vmem:[%s4 + $0x98] sm:$0xff] %vm1354, 0.0
      %1375 = vst.msk [vmem:[%s4 + $0xa0] sm:$0xff] %vm1354, 0.0
      %1376 = vst.msk [vmem:[%s4 + $0xa8] sm:$0xff] %vm1354, 0.0
      %1377 = vst.msk [vmem:[%s4 + $0xb0] sm:$0xff] %vm1354, 0.0
      %1378 = vst.msk [vmem:[%s4 + $0xb8] sm:$0xff] %vm1354, 0.0
      %1379 = vst.msk [vmem:[%s4 + $0xc0] sm:$0xff] %vm1354, 0.0
      %1380 = vst.msk [vmem:[%s4 + $0xc8] sm:$0xff] %vm1354, 0.0
      %1381 = vst.msk [vmem:[%s4 + $0xd0] sm:$0xff] %vm1354, 0.0
      %1382 = vst.msk [vmem:[%s4 + $0xd8] sm:$0xff] %vm1354, 0.0
      %1383 = vst.msk [vmem:[%s4 + $0xe0] sm:$0xff] %vm1354, 0.0
      %1384 = vst.msk [vmem:[%s4 + $0xe8] sm:$0xff] %vm1354, 0.0
      %1385 = vst.msk [vmem:[%s4 + $0xf0] sm:$0xff] %vm1354, 0.0
      %1386 = vst.msk [vmem:[%s4 + $0xf8] sm:$0xff] %vm1354, 0.0
      %1387 = vst.msk [vmem:[%s5] sm:$0xff] %vm1354, 0.0
      %1388 = vst.msk [vmem:[%s5 + $0x8] sm:$0xff] %vm1354, 0.0
      %1389 = vst.msk [vmem:[%s5 + $0x10] sm:$0xff] %vm1354, 0.0
      %1390 = vst.msk [vmem:[%s5 + $0x18] sm:$0xff] %vm1354, 0.0
      %1391 = vst.msk [vmem:[%s5 + $0x20] sm:$0xff] %vm1354, 0.0
      %1392 = vst.msk [vmem:[%s5 + $0x28] sm:$0xff] %vm1354, 0.0
      %1393 = vst.msk [vmem:[%s5 + $0x30] sm:$0xff] %vm1354, 0.0
      %1394 = vst.msk [vmem:[%s5 + $0x38] sm:$0xff] %vm1354, 0.0
      %1395 = vst.msk [vmem:[%s5 + $0x40] sm:$0xff] %vm1354, 0.0
      %1396 = vst.msk [vmem:[%s5 + $0x48] sm:$0xff] %vm1354, 0.0
      %1397 = vst.msk [vmem:[%s5 + $0x50] sm:$0xff] %vm1354, 0.0
      %1398 = vst.msk [vmem:[%s5 + $0x58] sm:$0xff] %vm1354, 0.0
      %1399 = vst.msk [vmem:[%s5 + $0x60] sm:$0xff] %vm1354, 0.0
      %1400 = vst.msk [vmem:[%s5 + $0x68] sm:$0xff] %vm1354, 0.0
      %1401 = vst.msk [vmem:[%s5 + $0x70] sm:$0xff] %vm1354, 0.0
      %1402 = vst.msk [vmem:[%s5 + $0x78] sm:$0xff] %vm1354, 0.0
      %1403 = vst.msk [vmem:[%s5 + $0x80] sm:$0xff] %vm1354, 0.0
      %1404 = vst.msk [vmem:[%s5 + $0x88] sm:$0xff] %vm1354, 0.0
      %1405 = vst.msk [vmem:[%s5 + $0x90] sm:$0xff] %vm1354, 0.0
      %1406 = vst.msk [vmem:[%s5 + $0x98] sm:$0xff] %vm1354, 0.0
      %1407 = vst.msk [vmem:[%s5 + $0xa0] sm:$0xff] %vm1354, 0.0
      %1408 = vst.msk [vmem:[%s5 + $0xa8] sm:$0xff] %vm1354, 0.0
      %1409 = vst.msk [vmem:[%s5 + $0xb0] sm:$0xff] %vm1354, 0.0
      %1410 = vst.msk [vmem:[%s5 + $0xb8] sm:$0xff] %vm1354, 0.0
      %1411 = vst.msk [vmem:[%s5 + $0xc0] sm:$0xff] %vm1354, 0.0
      %1412 = vst.msk [vmem:[%s5 + $0xc8] sm:$0xff] %vm1354, 0.0
      %1413 = vst.msk [vmem:[%s5 + $0xd0] sm:$0xff] %vm1354, 0.0
      %1414 = vst.msk [vmem:[%s5 + $0xd8] sm:$0xff] %vm1354, 0.0
      %1415 = vst.msk [vmem:[%s5 + $0xe0] sm:$0xff] %vm1354, 0.0
      %1416 = vst.msk [vmem:[%s5 + $0xe8] sm:$0xff] %vm1354, 0.0
      %1417 = vst.msk [vmem:[%s5 + $0xf0] sm:$0xff] %vm1354, 0.0
      %1418 = vst.msk [vmem:[%s5 + $0xf8] sm:$0xff] %vm1354, 0.0
    $region17: #{tpu_custom_call.1} parent=1 // pred_fallthru
      _
    %v1419 = vld [vmem:[%s4] sm:$0xff]
    %v1420 = vld [vmem:[%s4 + $0x8] sm:$0xff]
    %v1421 = vld [vmem:[%s4 + $0x10] sm:$0xff]
    %v1422 = vld [vmem:[%s4 + $0x18] sm:$0xff]
    %v1423 = vld [vmem:[%s4 + $0x20] sm:$0xff]
    %v1424 = vld [vmem:[%s4 + $0x28] sm:$0xff]
    %v1425 = vld [vmem:[%s4 + $0x30] sm:$0xff]
    %v1426 = vld [vmem:[%s4 + $0x38] sm:$0xff]
    %v1427 = vld [vmem:[%s4 + $0x40] sm:$0xff]
    %v1428 = vld [vmem:[%s4 + $0x48] sm:$0xff]
    %v1429 = vld [vmem:[%s4 + $0x50] sm:$0xff]
    %v1430 = vld [vmem:[%s4 + $0x58] sm:$0xff]
    %v1431 = vld [vmem:[%s4 + $0x60] sm:$0xff]
    %v1432 = vld [vmem:[%s4 + $0x68] sm:$0xff]
    %v1433 = vld [vmem:[%s4 + $0x70] sm:$0xff]
    %v1434 = vld [vmem:[%s4 + $0x78] sm:$0xff]
    %v1435 = vld [vmem:[%s4 + $0x80] sm:$0xff]
    %v1436 = vld [vmem:[%s4 + $0x88] sm:$0xff]
    %v1437 = vld [vmem:[%s4 + $0x90] sm:$0xff]
    %v1438 = vld [vmem:[%s4 + $0x98] sm:$0xff]
    %v1439 = vld [vmem:[%s4 + $0xa0] sm:$0xff]
    %v1440 = vld [vmem:[%s4 + $0xa8] sm:$0xff]
    %v1441 = vld [vmem:[%s4 + $0xb0] sm:$0xff]
    %v1442 = vld [vmem:[%s4 + $0xb8] sm:$0xff]
    %v1443 = vld [vmem:[%s4 + $0xc0] sm:$0xff]
    %v1444 = vld [vmem:[%s4 + $0xc8] sm:$0xff]
    %v1445 = vld [vmem:[%s4 + $0xd0] sm:$0xff]
    %v1446 = vld [vmem:[%s4 + $0xd8] sm:$0xff]
    %v1447 = vld [vmem:[%s4 + $0xe0] sm:$0xff]
    %v1448 = vld [vmem:[%s4 + $0xe8] sm:$0xff]
    %v1449 = vld [vmem:[%s4 + $0xf0] sm:$0xff]
    %v1450 = vld [vmem:[%s4 + $0xf8] sm:$0xff]
    %v1451 = vadd.f32 %v1029, %v1207
    %1452 = vadd.xlane.f32.xlu0 %v1451
    %v1453 = vpop.xlane.xlu0 %1452
    %v1454 = vadd.f32 %v1031, %v1209
    %1455 = vadd.xlane.f32.xlu0 %v1454
    %v1456 = vpop.xlane.xlu0 %1455
    %v1457 = vadd.f32 %v1034, %v1212
    %1458 = vadd.xlane.f32.xlu0 %v1457
    %v1459 = vpop.xlane.xlu0 %1458
    %v1460 = vadd.f32 %v1036, %v1214
    %1461 = vadd.xlane.f32.xlu0 %v1460
    %v1462 = vpop.xlane.xlu0 %1461
    %v1463 = vadd.f32 %v1039, %v1217
    %1464 = vadd.xlane.f32.xlu0 %v1463
    %v1465 = vpop.xlane.xlu0 %1464
    %v1466 = vadd.f32 %v1041, %v1219
    %1467 = vadd.xlane.f32.xlu0 %v1466
    %v1468 = vpop.xlane.xlu0 %1467
    %v1469 = vadd.f32 %v1044, %v1222
    %1470 = vadd.xlane.f32.xlu0 %v1469
    %v1471 = vpop.xlane.xlu0 %1470
    %v1472 = vadd.f32 %v1046, %v1224
    %1473 = vadd.xlane.f32.xlu0 %v1472
    %v1474 = vpop.xlane.xlu0 %1473
    %v1475 = vadd.f32 %v1049, %v1227
    %1476 = vadd.xlane.f32.xlu0 %v1475
    %v1477 = vpop.xlane.xlu0 %1476
    %v1478 = vadd.f32 %v1051, %v1229
    %1479 = vadd.xlane.f32.xlu0 %v1478
    %v1480 = vpop.xlane.xlu0 %1479
    %v1481 = vadd.f32 %v1054, %v1232
    %1482 = vadd.xlane.f32.xlu0 %v1481
    %v1483 = vpop.xlane.xlu0 %1482
    %v1484 = vadd.f32 %v1056, %v1234
    %1485 = vadd.xlane.f32.xlu0 %v1484
    %v1486 = vpop.xlane.xlu0 %1485
    %v1487 = vadd.f32 %v1059, %v1237
    %1488 = vadd.xlane.f32.xlu0 %v1487
    %v1489 = vpop.xlane.xlu0 %1488
    %v1490 = vadd.f32 %v1061, %v1239
    %1491 = vadd.xlane.f32.xlu0 %v1490
    %v1492 = vpop.xlane.xlu0 %1491
    %v1493 = vadd.f32 %v1064, %v1242
    %1494 = vadd.xlane.f32.xlu0 %v1493
    %v1495 = vpop.xlane.xlu0 %1494
    %v1496 = vadd.f32 %v1066, %v1244
    %1497 = vadd.xlane.f32.xlu0 %v1496
    %v1498 = vpop.xlane.xlu0 %1497
    %v1499 = vadd.f32 %v1069, %v1247
    %1500 = vadd.xlane.f32.xlu0 %v1499
    %v1501 = vpop.xlane.xlu0 %1500
    %v1502 = vadd.f32 %v1071, %v1249
    %1503 = vadd.xlane.f32.xlu0 %v1502
    %v1504 = vpop.xlane.xlu0 %1503
    %v1505 = vadd.f32 %v1074, %v1252
    %1506 = vadd.xlane.f32.xlu0 %v1505
    %v1507 = vpop.xlane.xlu0 %1506
    %v1508 = vadd.f32 %v1076, %v1254
    %1509 = vadd.xlane.f32.xlu0 %v1508
    %v1510 = vpop.xlane.xlu0 %1509
    %v1511 = vadd.f32 %v1079, %v1257
    %1512 = vadd.xlane.f32.xlu0 %v1511
    %v1513 = vpop.xlane.xlu0 %1512
    %v1514 = vadd.f32 %v1081, %v1259
    %1515 = vadd.xlane.f32.xlu0 %v1514
    %v1516 = vpop.xlane.xlu0 %1515
    %v1517 = vadd.f32 %v1084, %v1262
    %1518 = vadd.xlane.f32.xlu0 %v1517
    %v1519 = vpop.xlane.xlu0 %1518
    %v1520 = vadd.f32 %v1086, %v1264
    %1521 = vadd.xlane.f32.xlu0 %v1520
    %v1522 = vpop.xlane.xlu0 %1521
    %v1523 = vadd.f32 %v1089, %v1267
    %1524 = vadd.xlane.f32.xlu0 %v1523
    %v1525 = vpop.xlane.xlu0 %1524
    %v1526 = vadd.f32 %v1091, %v1269
    %1527 = vadd.xlane.f32.xlu0 %v1526
    %v1528 = vpop.xlane.xlu0 %1527
    %v1529 = vadd.f32 %v1094, %v1272
    %1530 = vadd.xlane.f32.xlu0 %v1529
    %v1531 = vpop.xlane.xlu0 %1530
    %v1532 = vadd.f32 %v1096, %v1274
    %1533 = vadd.xlane.f32.xlu0 %v1532
    %v1534 = vpop.xlane.xlu0 %1533
    %v1535 = vadd.f32 %v1099, %v1277
    %1536 = vadd.xlane.f32.xlu0 %v1535
    %v1537 = vpop.xlane.xlu0 %1536
    %v1538 = vadd.f32 %v1101, %v1279
    %1539 = vadd.xlane.f32.xlu0 %v1538
    %v1540 = vpop.xlane.xlu0 %1539
    %v1541 = vadd.f32 %v1104, %v1282
    %1542 = vadd.xlane.f32.xlu0 %v1541
    %v1543 = vpop.xlane.xlu0 %1542
    %v1544 = vadd.f32 %v1106, %v1284
    %1545 = vadd.xlane.f32.xlu0 %v1544
    %v1546 = vpop.xlane.xlu0 %1545
    %v1547 = vadd.f32 %v1419, %v1453
    %v1548 = vadd.f32 %v1420, %v1456
    %v1549 = vadd.f32 %v1421, %v1459
    %v1550 = vadd.f32 %v1422, %v1462
    %v1551 = vadd.f32 %v1423, %v1465
    %v1552 = vadd.f32 %v1424, %v1468
    %v1553 = vadd.f32 %v1425, %v1471
    %v1554 = vadd.f32 %v1426, %v1474
    %v1555 = vadd.f32 %v1427, %v1477
    %v1556 = vadd.f32 %v1428, %v1480
    %v1557 = vadd.f32 %v1429, %v1483
    %v1558 = vadd.f32 %v1430, %v1486
    %v1559 = vadd.f32 %v1431, %v1489
    %v1560 = vadd.f32 %v1432, %v1492
    %v1561 = vadd.f32 %v1433, %v1495
    %v1562 = vadd.f32 %v1434, %v1498
    %v1563 = vadd.f32 %v1435, %v1501
    %v1564 = vadd.f32 %v1436, %v1504
    %v1565 = vadd.f32 %v1437, %v1507
    %v1566 = vadd.f32 %v1438, %v1510
    %v1567 = vadd.f32 %v1439, %v1513
    %v1568 = vadd.f32 %v1440, %v1516
    %v1569 = vadd.f32 %v1441, %v1519
    %v1570 = vadd.f32 %v1442, %v1522
    %v1571 = vadd.f32 %v1443, %v1525
    %v1572 = vadd.f32 %v1444, %v1528
    %v1573 = vadd.f32 %v1445, %v1531
    %v1574 = vadd.f32 %v1446, %v1534
    %v1575 = vadd.f32 %v1447, %v1537
    %v1576 = vadd.f32 %v1448, %v1540
    %v1577 = vadd.f32 %v1449, %v1543
    %v1578 = vadd.f32 %v1450, %v1546
    %vm1579 = vcmask 7168
    %1580 = vst.msk [vmem:[%s4] sm:$0xff] %vm1579, %v1547
    %1581 = vst.msk [vmem:[%s4 + $0x8] sm:$0xff] %vm1579, %v1548
    %1582 = vst.msk [vmem:[%s4 + $0x10] sm:$0xff] %vm1579, %v1549
    %1583 = vst.msk [vmem:[%s4 + $0x18] sm:$0xff] %vm1579, %v1550
    %1584 = vst.msk [vmem:[%s4 + $0x20] sm:$0xff] %vm1579, %v1551
    %1585 = vst.msk [vmem:[%s4 + $0x28] sm:$0xff] %vm1579, %v1552
    %1586 = vst.msk [vmem:[%s4 + $0x30] sm:$0xff] %vm1579, %v1553
    %1587 = vst.msk [vmem:[%s4 + $0x38] sm:$0xff] %vm1579, %v1554
    %1588 = vst.msk [vmem:[%s4 + $0x40] sm:$0xff] %vm1579, %v1555
    %1589 = vst.msk [vmem:[%s4 + $0x48] sm:$0xff] %vm1579, %v1556
    %1590 = vst.msk [vmem:[%s4 + $0x50] sm:$0xff] %vm1579, %v1557
    %1591 = vst.msk [vmem:[%s4 + $0x58] sm:$0xff] %vm1579, %v1558
    %1592 = vst.msk [vmem:[%s4 + $0x60] sm:$0xff] %vm1579, %v1559
    %1593 = vst.msk [vmem:[%s4 + $0x68] sm:$0xff] %vm1579, %v1560
    %1594 = vst.msk [vmem:[%s4 + $0x70] sm:$0xff] %vm1579, %v1561
    %1595 = vst.msk [vmem:[%s4 + $0x78] sm:$0xff] %vm1579, %v1562
    %1596 = vst.msk [vmem:[%s4 + $0x80] sm:$0xff] %vm1579, %v1563
    %1597 = vst.msk [vmem:[%s4 + $0x88] sm:$0xff] %vm1579, %v1564
    %1598 = vst.msk [vmem:[%s4 + $0x90] sm:$0xff] %vm1579, %v1565
    %1599 = vst.msk [vmem:[%s4 + $0x98] sm:$0xff] %vm1579, %v1566
    %1600 = vst.msk [vmem:[%s4 + $0xa0] sm:$0xff] %vm1579, %v1567
    %1601 = vst.msk [vmem:[%s4 + $0xa8] sm:$0xff] %vm1579, %v1568
    %1602 = vst.msk [vmem:[%s4 + $0xb0] sm:$0xff] %vm1579, %v1569
    %1603 = vst.msk [vmem:[%s4 + $0xb8] sm:$0xff] %vm1579, %v1570
    %1604 = vst.msk [vmem:[%s4 + $0xc0] sm:$0xff] %vm1579, %v1571
    %1605 = vst.msk [vmem:[%s4 + $0xc8] sm:$0xff] %vm1579, %v1572
    %1606 = vst.msk [vmem:[%s4 + $0xd0] sm:$0xff] %vm1579, %v1573
    %1607 = vst.msk [vmem:[%s4 + $0xd8] sm:$0xff] %vm1579, %v1574
    %1608 = vst.msk [vmem:[%s4 + $0xe0] sm:$0xff] %vm1579, %v1575
    %1609 = vst.msk [vmem:[%s4 + $0xe8] sm:$0xff] %vm1579, %v1576
    %1610 = vst.msk [vmem:[%s4 + $0xf0] sm:$0xff] %vm1579, %v1577
    %1611 = vst.msk [vmem:[%s4 + $0xf8] sm:$0xff] %vm1579, %v1578
    %v1612 = vld [vmem:[%s5] sm:$0xff]
    %v1613 = vld [vmem:[%s5 + $0x8] sm:$0xff]
    %v1614 = vld [vmem:[%s5 + $0x10] sm:$0xff]
    %v1615 = vld [vmem:[%s5 + $0x18] sm:$0xff]
    %v1616 = vld [vmem:[%s5 + $0x20] sm:$0xff]
    %v1617 = vld [vmem:[%s5 + $0x28] sm:$0xff]
    %v1618 = vld [vmem:[%s5 + $0x30] sm:$0xff]
    %v1619 = vld [vmem:[%s5 + $0x38] sm:$0xff]
    %v1620 = vld [vmem:[%s5 + $0x40] sm:$0xff]
    %v1621 = vld [vmem:[%s5 + $0x48] sm:$0xff]
    %v1622 = vld [vmem:[%s5 + $0x50] sm:$0xff]
    %v1623 = vld [vmem:[%s5 + $0x58] sm:$0xff]
    %v1624 = vld [vmem:[%s5 + $0x60] sm:$0xff]
    %v1625 = vld [vmem:[%s5 + $0x68] sm:$0xff]
    %v1626 = vld [vmem:[%s5 + $0x70] sm:$0xff]
    %v1627 = vld [vmem:[%s5 + $0x78] sm:$0xff]
    %v1628 = vld [vmem:[%s5 + $0x80] sm:$0xff]
    %v1629 = vld [vmem:[%s5 + $0x88] sm:$0xff]
    %v1630 = vld [vmem:[%s5 + $0x90] sm:$0xff]
    %v1631 = vld [vmem:[%s5 + $0x98] sm:$0xff]
    %v1632 = vld [vmem:[%s5 + $0xa0] sm:$0xff]
    %v1633 = vld [vmem:[%s5 + $0xa8] sm:$0xff]
    %v1634 = vld [vmem:[%s5 + $0xb0] sm:$0xff]
    %v1635 = vld [vmem:[%s5 + $0xb8] sm:$0xff]
    %v1636 = vld [vmem:[%s5 + $0xc0] sm:$0xff]
    %v1637 = vld [vmem:[%s5 + $0xc8] sm:$0xff]
    %v1638 = vld [vmem:[%s5 + $0xd0] sm:$0xff]
    %v1639 = vld [vmem:[%s5 + $0xd8] sm:$0xff]
    %v1640 = vld [vmem:[%s5 + $0xe0] sm:$0xff]
    %v1641 = vld [vmem:[%s5 + $0xe8] sm:$0xff]
    %v1642 = vld [vmem:[%s5 + $0xf0] sm:$0xff]
    %v1643 = vld [vmem:[%s5 + $0xf8] sm:$0xff]
    %v1644 = vmul.f32 %v1029, %v1029
    %v1645 = vmul.f32 %v1207, %v1207
    %v1646 = vmul.f32 %v1031, %v1031
    %v1647 = vmul.f32 %v1209, %v1209
    %v1648 = vmul.f32 %v1034, %v1034
    %v1649 = vmul.f32 %v1212, %v1212
    %v1650 = vmul.f32 %v1036, %v1036
    %v1651 = vmul.f32 %v1214, %v1214
    %v1652 = vmul.f32 %v1039, %v1039
    %v1653 = vmul.f32 %v1217, %v1217
    %v1654 = vmul.f32 %v1041, %v1041
    %v1655 = vmul.f32 %v1219, %v1219
    %v1656 = vmul.f32 %v1044, %v1044
    %v1657 = vmul.f32 %v1222, %v1222
    %v1658 = vmul.f32 %v1046, %v1046
    %v1659 = vmul.f32 %v1224, %v1224
    %v1660 = vmul.f32 %v1049, %v1049
    %v1661 = vmul.f32 %v1227, %v1227
    %v1662 = vmul.f32 %v1051, %v1051
    %v1663 = vmul.f32 %v1229, %v1229
    %v1664 = vmul.f32 %v1054, %v1054
    %v1665 = vmul.f32 %v1232, %v1232
    %v1666 = vmul.f32 %v1056, %v1056
    %v1667 = vmul.f32 %v1234, %v1234
    %v1668 = vmul.f32 %v1059, %v1059
    %v1669 = vmul.f32 %v1237, %v1237
    %v1670 = vmul.f32 %v1061, %v1061
    %v1671 = vmul.f32 %v1239, %v1239
    %v1672 = vmul.f32 %v1064, %v1064
    %v1673 = vmul.f32 %v1242, %v1242
    %v1674 = vmul.f32 %v1066, %v1066
    %v1675 = vmul.f32 %v1244, %v1244
    %v1676 = vmul.f32 %v1069, %v1069
    %v1677 = vmul.f32 %v1247, %v1247
    %v1678 = vmul.f32 %v1071, %v1071
    %v1679 = vmul.f32 %v1249, %v1249
    %v1680 = vmul.f32 %v1074, %v1074
    %v1681 = vmul.f32 %v1252, %v1252
    %v1682 = vmul.f32 %v1076, %v1076
    %v1683 = vmul.f32 %v1254, %v1254
    %v1684 = vmul.f32 %v1079, %v1079
    %v1685 = vmul.f32 %v1257, %v1257
    %v1686 = vmul.f32 %v1081, %v1081
    %v1687 = vmul.f32 %v1259, %v1259
    %v1688 = vmul.f32 %v1084, %v1084
    %v1689 = vmul.f32 %v1262, %v1262
    %v1690 = vmul.f32 %v1086, %v1086
    %v1691 = vmul.f32 %v1264, %v1264
    %v1692 = vmul.f32 %v1089, %v1089
    %v1693 = vmul.f32 %v1267, %v1267
    %v1694 = vmul.f32 %v1091, %v1091
    %v1695 = vmul.f32 %v1269, %v1269
    %v1696 = vmul.f32 %v1094, %v1094
    %v1697 = vmul.f32 %v1272, %v1272
    %v1698 = vmul.f32 %v1096, %v1096
    %v1699 = vmul.f32 %v1274, %v1274
    %v1700 = vmul.f32 %v1099, %v1099
    %v1701 = vmul.f32 %v1277, %v1277
    %v1702 = vmul.f32 %v1101, %v1101
    %v1703 = vmul.f32 %v1279, %v1279
    %v1704 = vmul.f32 %v1104, %v1104
    %v1705 = vmul.f32 %v1282, %v1282
    %v1706 = vmul.f32 %v1106, %v1106
    %v1707 = vmul.f32 %v1284, %v1284
    %v1708 = vadd.f32 %v1644, %v1645
    %1709 = vadd.xlane.f32.xlu0 %v1708
    %v1710 = vpop.xlane.xlu0 %1709
    %v1711 = vadd.f32 %v1646, %v1647
    %1712 = vadd.xlane.f32.xlu0 %v1711
    %v1713 = vpop.xlane.xlu0 %1712
    %v1714 = vadd.f32 %v1648, %v1649
    %1715 = vadd.xlane.f32.xlu0 %v1714
    %v1716 = vpop.xlane.xlu0 %1715
    %v1717 = vadd.f32 %v1650, %v1651
    %1718 = vadd.xlane.f32.xlu0 %v1717
    %v1719 = vpop.xlane.xlu0 %1718
    %v1720 = vadd.f32 %v1652, %v1653
    %1721 = vadd.xlane.f32.xlu0 %v1720
    %v1722 = vpop.xlane.xlu0 %1721
    %v1723 = vadd.f32 %v1654, %v1655
    %1724 = vadd.xlane.f32.xlu0 %v1723
    %v1725 = vpop.xlane.xlu0 %1724
    %v1726 = vadd.f32 %v1656, %v1657
    %1727 = vadd.xlane.f32.xlu0 %v1726
    %v1728 = vpop.xlane.xlu0 %1727
    %v1729 = vadd.f32 %v1658, %v1659
    %1730 = vadd.xlane.f32.xlu0 %v1729
    %v1731 = vpop.xlane.xlu0 %1730
    %v1732 = vadd.f32 %v1660, %v1661
    %1733 = vadd.xlane.f32.xlu0 %v1732
    %v1734 = vpop.xlane.xlu0 %1733
    %v1735 = vadd.f32 %v1662, %v1663
    %1736 = vadd.xlane.f32.xlu0 %v1735
    %v1737 = vpop.xlane.xlu0 %1736
    %v1738 = vadd.f32 %v1664, %v1665
    %1739 = vadd.xlane.f32.xlu0 %v1738
    %v1740 = vpop.xlane.xlu0 %1739
    %v1741 = vadd.f32 %v1666, %v1667
    %1742 = vadd.xlane.f32.xlu0 %v1741
    %v1743 = vpop.xlane.xlu0 %1742
    %v1744 = vadd.f32 %v1668, %v1669
    %1745 = vadd.xlane.f32.xlu0 %v1744
    %v1746 = vpop.xlane.xlu0 %1745
    %v1747 = vadd.f32 %v1670, %v1671
    %1748 = vadd.xlane.f32.xlu0 %v1747
    %v1749 = vpop.xlane.xlu0 %1748
    %v1750 = vadd.f32 %v1672, %v1673
    %1751 = vadd.xlane.f32.xlu0 %v1750
    %v1752 = vpop.xlane.xlu0 %1751
    %v1753 = vadd.f32 %v1674, %v1675
    %1754 = vadd.xlane.f32.xlu0 %v1753
    %v1755 = vpop.xlane.xlu0 %1754
    %v1756 = vadd.f32 %v1676, %v1677
    %1757 = vadd.xlane.f32.xlu0 %v1756
    %v1758 = vpop.xlane.xlu0 %1757
    %v1759 = vadd.f32 %v1678, %v1679
    %1760 = vadd.xlane.f32.xlu0 %v1759
    %v1761 = vpop.xlane.xlu0 %1760
    %v1762 = vadd.f32 %v1680, %v1681
    %1763 = vadd.xlane.f32.xlu0 %v1762
    %v1764 = vpop.xlane.xlu0 %1763
    %v1765 = vadd.f32 %v1682, %v1683
    %1766 = vadd.xlane.f32.xlu0 %v1765
    %v1767 = vpop.xlane.xlu0 %1766
    %v1768 = vadd.f32 %v1684, %v1685
    %1769 = vadd.xlane.f32.xlu0 %v1768
    %v1770 = vpop.xlane.xlu0 %1769
    %v1771 = vadd.f32 %v1686, %v1687
    %1772 = vadd.xlane.f32.xlu0 %v1771
    %v1773 = vpop.xlane.xlu0 %1772
    %v1774 = vadd.f32 %v1688, %v1689
    %1775 = vadd.xlane.f32.xlu0 %v1774
    %v1776 = vpop.xlane.xlu0 %1775
    %v1777 = vadd.f32 %v1690, %v1691
    %1778 = vadd.xlane.f32.xlu0 %v1777
    %v1779 = vpop.xlane.xlu0 %1778
    %v1780 = vadd.f32 %v1692, %v1693
    %1781 = vadd.xlane.f32.xlu0 %v1780
    %v1782 = vpop.xlane.xlu0 %1781
    %v1783 = vadd.f32 %v1694, %v1695
    %1784 = vadd.xlane.f32.xlu0 %v1783
    %v1785 = vpop.xlane.xlu0 %1784
    %v1786 = vadd.f32 %v1696, %v1697
    %1787 = vadd.xlane.f32.xlu0 %v1786
    %v1788 = vpop.xlane.xlu0 %1787
    %v1789 = vadd.f32 %v1698, %v1699
    %1790 = vadd.xlane.f32.xlu0 %v1789
    %v1791 = vpop.xlane.xlu0 %1790
    %v1792 = vadd.f32 %v1700, %v1701
    %1793 = vadd.xlane.f32.xlu0 %v1792
    %v1794 = vpop.xlane.xlu0 %1793
    %v1795 = vadd.f32 %v1702, %v1703
    %1796 = vadd.xlane.f32.xlu0 %v1795
    %v1797 = vpop.xlane.xlu0 %1796
    %v1798 = vadd.f32 %v1704, %v1705
    %1799 = vadd.xlane.f32.xlu0 %v1798
    %v1800 = vpop.xlane.xlu0 %1799
    %v1801 = vadd.f32 %v1706, %v1707
    %1802 = vadd.xlane.f32.xlu0 %v1801
    %v1803 = vpop.xlane.xlu0 %1802
    %v1804 = vadd.f32 %v1612, %v1710
    %v1805 = vadd.f32 %v1613, %v1713
    %v1806 = vadd.f32 %v1614, %v1716
    %v1807 = vadd.f32 %v1615, %v1719
    %v1808 = vadd.f32 %v1616, %v1722
    %v1809 = vadd.f32 %v1617, %v1725
    %v1810 = vadd.f32 %v1618, %v1728
    %v1811 = vadd.f32 %v1619, %v1731
    %v1812 = vadd.f32 %v1620, %v1734
    %v1813 = vadd.f32 %v1621, %v1737
    %v1814 = vadd.f32 %v1622, %v1740
    %v1815 = vadd.f32 %v1623, %v1743
    %v1816 = vadd.f32 %v1624, %v1746
    %v1817 = vadd.f32 %v1625, %v1749
    %v1818 = vadd.f32 %v1626, %v1752
    %v1819 = vadd.f32 %v1627, %v1755
    %v1820 = vadd.f32 %v1628, %v1758
    %v1821 = vadd.f32 %v1629, %v1761
    %v1822 = vadd.f32 %v1630, %v1764
    %v1823 = vadd.f32 %v1631, %v1767
    %v1824 = vadd.f32 %v1632, %v1770
    %v1825 = vadd.f32 %v1633, %v1773
    %v1826 = vadd.f32 %v1634, %v1776
    %v1827 = vadd.f32 %v1635, %v1779
    %v1828 = vadd.f32 %v1636, %v1782
    %v1829 = vadd.f32 %v1637, %v1785
    %v1830 = vadd.f32 %v1638, %v1788
    %v1831 = vadd.f32 %v1639, %v1791
    %v1832 = vadd.f32 %v1640, %v1794
    %v1833 = vadd.f32 %v1641, %v1797
    %v1834 = vadd.f32 %v1642, %v1800
    %v1835 = vadd.f32 %v1643, %v1803
    %1836 = vst.msk [vmem:[%s5] sm:$0xff] %vm1579, %v1804
    %1837 = vst.msk [vmem:[%s5 + $0x8] sm:$0xff] %vm1579, %v1805
    %1838 = vst.msk [vmem:[%s5 + $0x10] sm:$0xff] %vm1579, %v1806
    %1839 = vst.msk [vmem:[%s5 + $0x18] sm:$0xff] %vm1579, %v1807
    %1840 = vst.msk [vmem:[%s5 + $0x20] sm:$0xff] %vm1579, %v1808
    %1841 = vst.msk [vmem:[%s5 + $0x28] sm:$0xff] %vm1579, %v1809
    %1842 = vst.msk [vmem:[%s5 + $0x30] sm:$0xff] %vm1579, %v1810
    %1843 = vst.msk [vmem:[%s5 + $0x38] sm:$0xff] %vm1579, %v1811
    %1844 = vst.msk [vmem:[%s5 + $0x40] sm:$0xff] %vm1579, %v1812
    %1845 = vst.msk [vmem:[%s5 + $0x48] sm:$0xff] %vm1579, %v1813
    %1846 = vst.msk [vmem:[%s5 + $0x50] sm:$0xff] %vm1579, %v1814
    %1847 = vst.msk [vmem:[%s5 + $0x58] sm:$0xff] %vm1579, %v1815
    %1848 = vst.msk [vmem:[%s5 + $0x60] sm:$0xff] %vm1579, %v1816
    %1849 = vst.msk [vmem:[%s5 + $0x68] sm:$0xff] %vm1579, %v1817
    %1850 = vst.msk [vmem:[%s5 + $0x70] sm:$0xff] %vm1579, %v1818
    %1851 = vst.msk [vmem:[%s5 + $0x78] sm:$0xff] %vm1579, %v1819
    %1852 = vst.msk [vmem:[%s5 + $0x80] sm:$0xff] %vm1579, %v1820
    %1853 = vst.msk [vmem:[%s5 + $0x88] sm:$0xff] %vm1579, %v1821
    %1854 = vst.msk [vmem:[%s5 + $0x90] sm:$0xff] %vm1579, %v1822
    %1855 = vst.msk [vmem:[%s5 + $0x98] sm:$0xff] %vm1579, %v1823
    %1856 = vst.msk [vmem:[%s5 + $0xa0] sm:$0xff] %vm1579, %v1824
    %1857 = vst.msk [vmem:[%s5 + $0xa8] sm:$0xff] %vm1579, %v1825
    %1858 = vst.msk [vmem:[%s5 + $0xb0] sm:$0xff] %vm1579, %v1826
    %1859 = vst.msk [vmem:[%s5 + $0xb8] sm:$0xff] %vm1579, %v1827
    %1860 = vst.msk [vmem:[%s5 + $0xc0] sm:$0xff] %vm1579, %v1828
    %1861 = vst.msk [vmem:[%s5 + $0xc8] sm:$0xff] %vm1579, %v1829
    %1862 = vst.msk [vmem:[%s5 + $0xd0] sm:$0xff] %vm1579, %v1830
    %1863 = vst.msk [vmem:[%s5 + $0xd8] sm:$0xff] %vm1579, %v1831
    %1864 = vst.msk [vmem:[%s5 + $0xe0] sm:$0xff] %vm1579, %v1832
    %1865 = vst.msk [vmem:[%s5 + $0xe8] sm:$0xff] %vm1579, %v1833
    %1866 = vst.msk [vmem:[%s5 + $0xf0] sm:$0xff] %vm1579, %v1834
    %1867 = vst.msk [vmem:[%s5 + $0xf8] sm:$0xff] %vm1579, %v1835
    // Predicated region
    $region18: #{tpu_custom_call.1} parent=1 // pred_check
      _
    $region19: #{tpu_custom_call.1} parent=1 // pred_check_branch
      %1869 = sbr.rel (0) target = $region21
    $region20: #{tpu_custom_call.1} parent=1 // pred_region
      %1871 = vsyncadd [#allocation4], 0
      %s1872 = sshll.u32 [#allocation3], 4
      %s1873 = int_to_ptr.vmem [resolvable:$true] %s1872
      %s1874 = sshll.u32 %s3, 4
      %s1875 = int_to_ptr.hbm [resolvable:$true] %s1874
      %1880 = dma.vmem_to_hbm [thread:$0]  %s1873, 8192, %s1875, [#allocation4], 256, 256, 16
    $region21: #{tpu_custom_call.1} parent=1 // pred_fallthru
      _
    // Predicated region
    $region22: #{tpu_custom_call.1} parent=1 // pred_check
      _
    $region23: #{tpu_custom_call.1} parent=1 // pred_check_branch
      %1882 = sbr.rel (0) target = $region25
    $region24: #{tpu_custom_call.1} parent=1 // pred_region
      _
    $region25: #{tpu_custom_call.1} parent=1 // pred_fallthru
      _
    // Predicated region
    $region26: #{tpu_custom_call.1} parent=1 // pred_check
      _
    $region27: #{tpu_custom_call.1} parent=1 // pred_check_branch
      %1884 = sbr.rel (0) target = $region29
    $region28: #{tpu_custom_call.1} parent=1 // pred_region
      _
    $region29: #{tpu_custom_call.1} parent=1 // pred_fallthru
      _
    // Predicated region
    $region30: #{tpu_custom_call.1} parent=1 // pred_check
      _
    $region31: #{tpu_custom_call.1} parent=1 // pred_check_branch
      %1886 = sbr.rel (0) target = $region33
    $region32: #{tpu_custom_call.1} parent=1 // pred_region
      %1888 = dma.done [#allocation4], 8192
    $region33: #{tpu_custom_call.1} parent=1 // pred_fallthru
      _
    // Predicated region
    $region34: #{tpu_custom_call.1} parent=1 // pred_check
      _
    $region35: #{tpu_custom_call.1} parent=1 // pred_check_branch
      %1890 = sbr.rel (0) target = $region37
    $region36: #{tpu_custom_call.1} parent=1 // pred_region
      _
    $region37: #{tpu_custom_call.1} parent=1 // pred_fallthru
      _
    // Predicated region
    $region38: #{tpu_custom_call.1} parent=1 // pred_check
      _
    $region39: #{tpu_custom_call.1} parent=1 // pred_check_branch
      %1892 = sbr.rel (0) target = $region41
    $region40: #{tpu_custom_call.1} parent=1 // pred_region
      _
    $region41: #{tpu_custom_call.1} parent=1 // pred_fallthru
      _
    %1893 = vsyncpa [#allocation4], 1

</llo_original>
